<compile_context>
chip_gen: v7x
topology: tpu7x:2x2x1
jax: 0.10.0
libtpu: 0.0.40
codegen_flags: <defaults>
</compile_context>

<pallas_src>
import functools

import jax
import jax.numpy as jnp
from jax.experimental import pallas as pl
from jax.experimental.pallas import tpu as pltpu

N_EDGE_FEAT = 16
N_NODE_FEAT = 16
F_ALL = N_EDGE_FEAT + N_NODE_FEAT            # 32
HIDDEN = 2 * F_ALL                           # 64 (Mlp default n_hidden_factor=2)

# Packed slab rows: [ef 0:16 | 1.0 @16 | fu 17:33 | fv 33:49 | u @49 | v @50]
ROW_ONES = N_EDGE_FEAT                       # 16
ROW_U = 1 + N_EDGE_FEAT + 2 * N_NODE_FEAT    # 49
F_PACK = ROW_U + 2                           # 51

TILE_E_MAX = 1024                            # sweep 512-2048; keep multiple of 256
BETA = 0.85


def _cdiv(a, b):
    return -(-a // b)


def _round_up(x, m):
    return _cdiv(x, m) * m


# ------------------------------ kernel helpers --------------------------------
def _sigmoid(x):
    # tanh form: single EUP op, no exp overflow.
    return 0.5 * jnp.tanh(0.5 * x) + 0.5


# --------------------------------- the kernel ---------------------------------
def edge_priority_kernel(
    x_ref,                                    # [F_PACK, TILE_E] packed slab
    wn_ref,                                   # [16, 33]  node weights (bias folded)
    w1e_ref, w1n_ref,                         # [128, 17], [128, 16] fused layer 1
    w2_ref, b2_ref,                           # [128, 128], [128, 1]
    w3_ref, b3_ref,                           # [2, 128],   [2, 1]
    pw1_ref, pw2_ref, pw3_ref,                # [10, 8], [10, 10], [1, 10] tail MLP
    out_ref,                                  # [1, 1, TILE_E]
    feat_sc,                                  # VMEM scratch [8, TILE_E]
):
    dot = functools.partial(jnp.dot, preferred_element_type=jnp.float32)

    ef1_t = x_ref[0:ROW_ONES + 1, :]          # [17, E] = [ef | 1.0]
    nodes1_t = x_ref[ROW_ONES:ROW_U, :]       # [33, E] = [1.0 | fu | fv]
    uv = x_ref[ROW_U:ROW_U + 2, :]            # [2, E]  = [u; v]

    # node_to_edge_feat_module (synthetic): relu(Linear(cat([fu, fv], 1))).
    # Single K=33 dot: fu|fv merged, bias folded via the shared 1.0 row.
    fn_t = jnp.maximum(dot(wn_ref[...], nodes1_t), 0.0)                 # [16, E]

    # Fused raw_prio | gamma Mlp (linear->relu->linear->relu->dropout(id)->linear).
    h = jnp.maximum(dot(w1e_ref[...], ef1_t) + dot(w1n_ref[...], fn_t), 0.0)
    h = jnp.maximum(dot(w2_ref[...], h) + b2_ref[...], 0.0)             # [128, E]
    o = dot(w3_ref[...], h) + b3_ref[...]                               # [2, E]

    sg = _sigmoid(o)                          # one batched sigmoid for both rows
    raw_prio = sg[0:1, :]                                               # [1, E]
    gamma = sg[1:2, :]                                                  # [1, E]

    # SizeRegularizer: 1/((1/u)^g + (1/v)^g) == 1/(exp(-g*ln u) + exp(-g*ln v)).
    # log/exp batched on the [2, E] (u, v) rows.
    e_uv = jnp.exp(-gamma * jnp.log(uv))                                # [2, E]
    size_reg = pl.reciprocal(e_uv[0:1, :] + e_uv[1:2, :], approx=False)
    size_weighted_prio = raw_prio * size_reg * 0.01

    # TODO(synk): PyTorch applies torch.unsqueeze(size_reg, 0), which makes the
    # subsequent torch.cat(dim=1) a rank mismatch; we follow the evident intent
    # and keep size_reg aligned with raw_prio.

    # mlp_prio: 3 -> 9 -> 9 -> 1 on the MXU.  feat row 3 is a constant 1.0 that
    # folds all three biases (it is carried through rows 9 of h1/h2).
    lanes = raw_prio.shape[-1]
    feat_sc[0:1, :] = raw_prio
    feat_sc[1:2, :] = size_reg
    feat_sc[2:3, :] = size_weighted_prio
    feat_sc[3:4, :] = jnp.ones((1, lanes), jnp.float32)
    feat_sc[4:8, :] = jnp.zeros((4, lanes), jnp.float32)
    h1 = jnp.maximum(dot(pw1_ref[...], feat_sc[...]), 0.0)              # [10, E]
    h2 = jnp.maximum(dot(pw2_ref[...], h1), 0.0)                        # [10, E]
    prio = _sigmoid(dot(pw3_ref[...], h2))                              # [1, E]

    out_ref[...] = (BETA * prio + (1.0 - BETA) * raw_prio).reshape(out_ref.shape)


# --------------------------- params & weight packing ---------------------------
def init_params(key):
    def lin(k, n_in, n_out):
        kw, kb = jax.random.split(k)
        w = jax.random.normal(kw, (n_in, n_out), jnp.float32) / jnp.sqrt(float(n_in))
        b = jax.random.normal(kb, (1, n_out), jnp.float32) * 0.01
        return w, b

    keys = jax.random.split(key, 10)
    return {
        "node": lin(keys[0], 2 * N_NODE_FEAT, N_NODE_FEAT),
        "raw": (lin(keys[1], F_ALL, HIDDEN), lin(keys[2], HIDDEN, HIDDEN),
                lin(keys[3], HIDDEN, 1)),
        "gamma": (lin(keys[4], F_ALL, HIDDEN), lin(keys[5], HIDDEN, HIDDEN),
                  lin(keys[6], HIDDEN, 1)),
        "prio": (lin(keys[7], 3, 9), lin(keys[8], 9, 9), lin(keys[9], 9, 1)),
    }


def _prep_weights(params):
    wn, bn = params["node"]                                     # [32,16], [1,16]
    (rw1, rb1), (rw2, rb2), (rw3, rb3) = params["raw"]
    (gw1, gb1), (gw2, gb2), (gw3, gb3) = params["gamma"]
    (pw1, pb1), (pw2, pb2), (pw3, pb3) = params["prio"]

    # node module: columns ordered [bias | fu | fv] to match slab rows 16:49.
    wn_aug = jnp.concatenate(
        [bn.T, wn[:N_NODE_FEAT, :].T, wn[N_NODE_FEAT:, :].T], axis=1)      # [16, 33]

    # fused raw|gamma layer 1, split over [ef|1.0] and from_nodes.
    w1 = jnp.concatenate([rw1, gw1], axis=1)                               # [32, 128]
    b1 = jnp.concatenate([rb1, gb1], axis=1)                               # [1, 128]
    w1e_aug = jnp.concatenate([w1[:N_EDGE_FEAT, :].T, b1.T], axis=1)       # [128, 17]
    w1n_t = w1[N_EDGE_FEAT:, :].T                                          # [128, 16]

    # layer 2: block-diagonal; bias kept as a [128,1] column (broadcast in-kernel).
    w2 = jnp.zeros((2 * HIDDEN, 2 * HIDDEN), jnp.float32)
    w2 = w2.at[:HIDDEN, :HIDDEN].set(rw2).at[HIDDEN:, HIDDEN:].set(gw2)
    w2_t = w2.T
    b2_col = jnp.concatenate([rb2, gb2], axis=1).T                         # [128, 1]

    # layer 3: two output rows (raw logit, gamma logit).
    w3 = jnp.zeros((2 * HIDDEN, 2), jnp.float32)
    w3 = w3.at[:HIDDEN, 0].set(rw3[:, 0]).at[HIDDEN:, 1].set(gw3[:, 0])
    w3_t = w3.T                                                            # [2, 128]
    b3_col = jnp.concatenate([rb3, gb3], axis=1).T                         # [2, 1]

    # tail 3->9->9->1 MLP for the MXU; biases folded through the constant row
    # (feat row 3 == 1.0, carried as h1 row 9 and h2 row 9).
    pw1_aug = jnp.zeros((10, 8), jnp.float32)
    pw1_aug = pw1_aug.at[:9, :3].set(pw1.T).at[:9, 3].set(pb1[0]).at[9, 3].set(1.0)
    pw2_aug = jnp.zeros((10, 10), jnp.float32)
    pw2_aug = pw2_aug.at[:9, :9].set(pw2.T).at[:9, 9].set(pb2[0]).at[9, 9].set(1.0)
    pw3_aug = jnp.concatenate([pw3.T, pb3], axis=1)                        # [1, 10]

    return (wn_aug, w1e_aug, w1n_t, w2_t, b2_col, w3_t, b3_col,
            pw1_aug, pw2_aug, pw3_aug)


# ----------------------------------- wrapper -----------------------------------
def choose_tile_e(n, tile_max=TILE_E_MAX):
    # Largest tile <= tile_max (multiple of 256) that keeps >= 2 grid steps when
    # n allows it, so v7x's second TensorCore gets work via dimension_semantics.
    return int(min(tile_max, max(256, _round_up(_cdiv(n, 2), 256))))


def pack_edge_inputs(edge_features, fu, fv, u_size, v_size, tile_e):
    """[N, F] inputs -> the [F_PACK, n_pad] transposed slab the kernel consumes.

    Producers that can emit (or cache) this layout directly should call
    edge_priority_forward_packed and skip this repack — it removes an HBM
    round trip that otherwise ~doubles the kernel's memory traffic.
    """
    n = edge_features.shape[0]
    n_pad = _cdiv(n, tile_e) * tile_e

    def pad_t(x, cval=0.0):           # [n, f] -> [f, n_pad]
        return jnp.pad(x.T.astype(jnp.float32), ((0, 0), (0, n_pad - n)),
                       constant_values=cval)

    ones = jnp.ones((1, n_pad), jnp.float32)   # bias-folding row (shared by 2 dots)
    # u/v padded with 1.0 so log() stays finite in dead lanes.
    return jnp.concatenate(
        [pad_t(edge_features), ones, pad_t(fu), pad_t(fv),
         pad_t(u_size, 1.0), pad_t(v_size, 1.0)], axis=0)      # [F_PACK, n_pad]


def edge_priority_forward_packed(params, slab, *, tile_e):
    f_pack, n_pad = slab.shape
    assert f_pack == F_PACK and n_pad % tile_e == 0 and tile_e % 256 == 0
    n_tiles = n_pad // tile_e
    weights = _prep_weights(params)

    def resident(shape):              # weights stay in VMEM across grid steps
        return pl.BlockSpec(shape, lambda i: (0, 0))

    in_specs = [
        pl.BlockSpec((F_PACK, tile_e), lambda i: (0, i)),     # slab, tiled over edges
        resident((N_NODE_FEAT, 2 * N_NODE_FEAT + 1)),         # wn_aug   (16, 33)
        resident((2 * HIDDEN, N_EDGE_FEAT + 1)),              # w1e_aug  (128, 17)
        resident((2 * HIDDEN, N_NODE_FEAT)),                  # w1n_t    (128, 16)
        resident((2 * HIDDEN, 2 * HIDDEN)),                   # w2_t
        resident((2 * HIDDEN, 1)),                            # b2_col
        resident((2, 2 * HIDDEN)),                            # w3_t
        resident((2, 1)),                                     # b3_col
        resident((10, 8)),                                    # pw1_aug
        resident((10, 10)),                                   # pw2_aug
        resident((1, 10)),                                    # pw3_aug
    ]

    out = pl.pallas_call(
        edge_priority_kernel,
        grid=(n_tiles,),
        in_specs=in_specs,
        out_specs=pl.BlockSpec((1, 1, tile_e), lambda i: (i, 0, 0)),
        out_shape=jax.ShapeDtypeStruct((n_tiles, 1, tile_e), jnp.float32),
        scratch_shapes=[pltpu.VMEM((8, tile_e), jnp.float32)],
        compiler_params=pltpu.CompilerParams(
            dimension_semantics=("parallel",),      # v7x megacore; harmless on v5e/v6e
            # Footprint at tile_e=1024: slab ~200KB x2 bufs + ~0.7MB intermediates
            # -> well under v7x's 64 MiB / 32 MiB scoped default.
            vmem_limit_bytes=32 * 1024 * 1024),
    )(slab, *weights)

    return out.reshape(n_tiles * tile_e)   # padded flat; caller slices [:n]


def edge_priority_forward(params, edge_features, fu, fv, e_size, u_size, v_size,
                          *, tile_e=None, return_padded=True):
    del e_size                      # unused by the PyTorch forward
    n = edge_features.shape[0]
    if tile_e is None:
        tile_e = choose_tile_e(n)
    # TODO(synk): with a producer that emits the packed [F_PACK, N] layout (or
    # CompilerParams(allow_input_fusion=...)), this repack and its extra HBM
    # round trip disappear entirely.
    slab = pack_edge_inputs(edge_features, fu, fv, u_size, v_size, tile_e)
    out_flat = edge_priority_forward_packed(params, slab, tile_e=tile_e)
    if return_padded:
        return out_flat             # [n_pad]; avoids an extra [n,1] relayout copy
    return out_flat[:n, None]       # module-shaped [n, 1]


# ----------------------------- pure-JAX reference ------------------------------
def _mlp_ref(x, p, final_nl):
    (w1, b1), (w2, b2), (w3, b3) = p
    h = jnp.maximum(x @ w1 + b1, 0.0)
    h = jnp.maximum(h @ w2 + b2, 0.0)
    o = h @ w3 + b3
    return jax.nn.sigmoid(o) if final_nl == "sigmoid" else jnp.maximum(o, 0.0)


def reference_forward(params, edge_features, fu, fv, e_size, u_size, v_size):
    del e_size
    wn, bn = params["node"]
    from_nodes = jnp.maximum(jnp.concatenate([fu, fv], 1) @ wn + bn, 0.0)
    all_feat = jnp.concatenate([edge_features, from_nodes], 1)
    raw_prio = _mlp_ref(all_feat, params["raw"], "sigmoid")
    gamma = _mlp_ref(all_feat, params["gamma"], "sigmoid")
    size_reg = 1.0 / ((1.0 / u_size) ** gamma + (1.0 / v_size) ** gamma)
    swp = raw_prio * size_reg / 100.0
    final_feat = jnp.concatenate([raw_prio, size_reg, swp], 1)
    return 0.85 * _mlp_ref(final_feat, params["prio"], "sigmoid") + 0.15 * raw_prio


# ------------------------------------ main --------------------------------------
if __name__ == "__main__":
    key = jax.random.PRNGKey(0)
    kp, kd = jax.random.split(key)
    params = init_params(kp)

    N_EDGES = 400   # not a multiple of the tile -> exercises padding + 2 grid steps
    k1, k2, k3, k4, k5, k6 = jax.random.split(kd, 6)
    edge_features = jax.random.normal(k1, (N_EDGES, N_EDGE_FEAT), jnp.float32)
    fu = jax.random.normal(k2, (N_EDGES, N_NODE_FEAT), jnp.float32)
    fv = jax.random.normal(k3, (N_EDGES, N_NODE_FEAT), jnp.float32)
    e_size = jax.random.uniform(k4, (N_EDGES, 1), jnp.float32, 1.0, 10.0)
    u_size = jax.random.uniform(k5, (N_EDGES, 1), jnp.float32, 1.0, 10.0)
    v_size = jax.random.uniform(k6, (N_EDGES, 1), jnp.float32, 1.0, 10.0)

    out_flat = edge_priority_forward(params, edge_features, fu, fv,
                                     e_size, u_size, v_size)
    out_flat = jax.block_until_ready(out_flat)
    pred = out_flat[:N_EDGES]

    ref = reference_forward(params, edge_features, fu, fv,
                            e_size, u_size, v_size)[:, 0]
    assert pred.shape == (N_EDGES,)
    max_err = float(jnp.max(jnp.abs(pred - ref)))
    assert jnp.allclose(pred, ref, atol=2e-5, rtol=2e-5), max_err
    print("KERNEL_OK")
</pallas_src>

<mosaic_0001>
module attributes {stable_mosaic.version = 11 : i64} {
  func.func @edge_priority_kernel(%arg0: i32, %arg1: memref<51x256xf32, #tpu.memory_space<vmem>>, %arg2: memref<16x33xf32, #tpu.memory_space<vmem>>, %arg3: memref<128x17xf32, #tpu.memory_space<vmem>>, %arg4: memref<128x16xf32, #tpu.memory_space<vmem>>, %arg5: memref<128x128xf32, #tpu.memory_space<vmem>>, %arg6: memref<128x1xf32, #tpu.memory_space<vmem>>, %arg7: memref<2x128xf32, #tpu.memory_space<vmem>>, %arg8: memref<2x1xf32, #tpu.memory_space<vmem>>, %arg9: memref<10x8xf32, #tpu.memory_space<vmem>>, %arg10: memref<10x10xf32, #tpu.memory_space<vmem>>, %arg11: memref<1x10xf32, #tpu.memory_space<vmem>>, %arg12: memref<1x1x256xf32, #tpu.memory_space<vmem>>, %arg13: memref<8x256xf32, #tpu.memory_space<vmem>>) attributes {dimension_semantics = [#tpu.dimension_semantics<parallel>], iteration_bounds = array<i64: 2>, scalar_prefetch = 0 : i64, scratch_operands = 1 : i64, tpu.core_type = #tpu.core_type<tc>, window_params = [{transform_indices = @transform_0, window_bounds = array<i64: 51, 256>}, {pipeline_mode = #tpu.pipeline_mode<synchronous>, transform_indices = @transform_1, window_bounds = array<i64: 16, 33>}, {pipeline_mode = #tpu.pipeline_mode<synchronous>, transform_indices = @transform_2, window_bounds = array<i64: 128, 17>}, {pipeline_mode = #tpu.pipeline_mode<synchronous>, transform_indices = @transform_3, window_bounds = array<i64: 128, 16>}, {pipeline_mode = #tpu.pipeline_mode<synchronous>, transform_indices = @transform_4, window_bounds = array<i64: 128, 128>}, {pipeline_mode = #tpu.pipeline_mode<synchronous>, transform_indices = @transform_5, window_bounds = array<i64: 128, 1>}, {pipeline_mode = #tpu.pipeline_mode<synchronous>, transform_indices = @transform_6, window_bounds = array<i64: 2, 128>}, {pipeline_mode = #tpu.pipeline_mode<synchronous>, transform_indices = @transform_7, window_bounds = array<i64: 2, 1>}, {pipeline_mode = #tpu.pipeline_mode<synchronous>, transform_indices = @transform_8, window_bounds = array<i64: 10, 8>}, {pipeline_mode = #tpu.pipeline_mode<synchronous>, transform_indices = @transform_9, window_bounds = array<i64: 10, 10>}, {pipeline_mode = #tpu.pipeline_mode<synchronous>, transform_indices = @transform_10, window_bounds = array<i64: 1, 10>}, {transform_indices = @transform_11, window_bounds = array<i64: 1, 1, 256>}]} {
    %c0 = arith.constant 0 : index
    %c0_0 = arith.constant 0 : index
    %0 = vector.load %arg1[%c0, %c0_0] : memref<51x256xf32, #tpu.memory_space<vmem>>, vector<17x256xf32>
    %c16 = arith.constant 16 : index
    %c0_1 = arith.constant 0 : index
    %1 = vector.load %arg1[%c16, %c0_1] : memref<51x256xf32, #tpu.memory_space<vmem>>, vector<33x256xf32>
    %c49 = arith.constant 49 : index
    %c0_2 = arith.constant 0 : index
    %2 = vector.load %arg1[%c49, %c0_2] : memref<51x256xf32, #tpu.memory_space<vmem>>, vector<2x256xf32>
    %c0_3 = arith.constant 0 : index
    %c0_4 = arith.constant 0 : index
    %3 = vector.load %arg2[%c0_3, %c0_4] : memref<16x33xf32, #tpu.memory_space<vmem>>, vector<16x33xf32>
    %cst = arith.constant dense<0.000000e+00> : vector<16x256xf32>
    %4 = tpu.matmul %3, %1, %cst {dimension_numbers = #tpu.dot_dimension_numbers<[1], [0], [0], [1], [0, 0, 1, 1], [], []>} : vector<16x33xf32>, vector<33x256xf32>, vector<16x256xf32> -> vector<16x256xf32>
    %cst_5 = arith.constant 0.000000e+00 : f32
    %5 = vector.broadcast %cst_5 : f32 to vector<16x256xf32>
    %6 = arith.maximumf %4, %5 : vector<16x256xf32>
    %c0_6 = arith.constant 0 : index
    %c0_7 = arith.constant 0 : index
    %7 = vector.load %arg3[%c0_6, %c0_7] : memref<128x17xf32, #tpu.memory_space<vmem>>, vector<128x17xf32>
    %cst_8 = arith.constant dense<0.000000e+00> : vector<128x256xf32>
    %8 = tpu.matmul %7, %0, %cst_8 {dimension_numbers = #tpu.dot_dimension_numbers<[1], [0], [0], [1], [0, 0, 1, 1], [], []>} : vector<128x17xf32>, vector<17x256xf32>, vector<128x256xf32> -> vector<128x256xf32>
    %c0_9 = arith.constant 0 : index
    %c0_10 = arith.constant 0 : index
    %9 = vector.load %arg4[%c0_9, %c0_10] : memref<128x16xf32, #tpu.memory_space<vmem>>, vector<128x16xf32>
    %cst_11 = arith.constant dense<0.000000e+00> : vector<128x256xf32>
    %10 = tpu.matmul %9, %6, %cst_11 {dimension_numbers = #tpu.dot_dimension_numbers<[1], [0], [0], [1], [0, 0, 1, 1], [], []>} : vector<128x16xf32>, vector<16x256xf32>, vector<128x256xf32> -> vector<128x256xf32>
    %11 = arith.addf %8, %10 : vector<128x256xf32>
    %cst_12 = arith.constant 0.000000e+00 : f32
    %12 = vector.broadcast %cst_12 : f32 to vector<128x256xf32>
    %13 = arith.maximumf %11, %12 : vector<128x256xf32>
    %c0_13 = arith.constant 0 : index
    %c0_14 = arith.constant 0 : index
    %14 = vector.load %arg5[%c0_13, %c0_14] : memref<128x128xf32, #tpu.memory_space<vmem>>, vector<128x128xf32>
    %cst_15 = arith.constant dense<0.000000e+00> : vector<128x256xf32>
    %15 = tpu.matmul %14, %13, %cst_15 {dimension_numbers = #tpu.dot_dimension_numbers<[1], [0], [0], [1], [0, 0, 1, 1], [], []>} : vector<128x128xf32>, vector<128x256xf32>, vector<128x256xf32> -> vector<128x256xf32>
    %c0_16 = arith.constant 0 : index
    %c0_17 = arith.constant 0 : index
    %16 = vector.load %arg6[%c0_16, %c0_17] : memref<128x1xf32, #tpu.memory_space<vmem>>, vector<128x1xf32>
    %17 = vector.broadcast %16 : vector<128x1xf32> to vector<128x256xf32>
    %18 = arith.addf %15, %17 : vector<128x256xf32>
    %cst_18 = arith.constant 0.000000e+00 : f32
    %19 = vector.broadcast %cst_18 : f32 to vector<128x256xf32>
    %20 = arith.maximumf %18, %19 : vector<128x256xf32>
    %c0_19 = arith.constant 0 : index
    %c0_20 = arith.constant 0 : index
    %21 = vector.load %arg7[%c0_19, %c0_20] : memref<2x128xf32, #tpu.memory_space<vmem>>, vector<2x128xf32>
    %cst_21 = arith.constant dense<0.000000e+00> : vector<2x256xf32>
    %22 = tpu.matmul %21, %20, %cst_21 {dimension_numbers = #tpu.dot_dimension_numbers<[1], [0], [0], [1], [0, 0, 1, 1], [], []>} : vector<2x128xf32>, vector<128x256xf32>, vector<2x256xf32> -> vector<2x256xf32>
    %c0_22 = arith.constant 0 : index
    %c0_23 = arith.constant 0 : index
    %23 = vector.load %arg8[%c0_22, %c0_23] : memref<2x1xf32, #tpu.memory_space<vmem>>, vector<2x1xf32>
    %24 = vector.broadcast %23 : vector<2x1xf32> to vector<2x256xf32>
    %25 = arith.addf %22, %24 : vector<2x256xf32>
    %cst_24 = arith.constant 5.000000e-01 : f32
    %26 = vector.broadcast %cst_24 : f32 to vector<2x256xf32>
    %27 = arith.mulf %26, %25 : vector<2x256xf32>
    %28 = math.tanh %27 : vector<2x256xf32>
    %cst_25 = arith.constant 5.000000e-01 : f32
    %29 = vector.broadcast %cst_25 : f32 to vector<2x256xf32>
    %30 = arith.mulf %29, %28 : vector<2x256xf32>
    %cst_26 = arith.constant 5.000000e-01 : f32
    %31 = vector.broadcast %cst_26 : f32 to vector<2x256xf32>
    %32 = arith.addf %30, %31 : vector<2x256xf32>
    %33 = vector.extract_strided_slice %32 {offsets = [0, 0], sizes = [1, 256], strides = [1, 1]} : vector<2x256xf32> to vector<1x256xf32>
    %34 = vector.extract_strided_slice %32 {offsets = [1, 0], sizes = [1, 256], strides = [1, 1]} : vector<2x256xf32> to vector<1x256xf32>
    %cst_27 = arith.constant 0.000000e+00 : f32
    %35 = vector.broadcast %cst_27 : f32 to vector<1x256xf32>
    %36 = arith.subf %35, %34 : vector<1x256xf32>
    %37 = math.log %2 : vector<2x256xf32>
    %38 = vector.broadcast %36 : vector<1x256xf32> to vector<2x256xf32>
    %39 = arith.mulf %38, %37 : vector<2x256xf32>
    %40 = math.exp %39 : vector<2x256xf32>
    %41 = vector.extract_strided_slice %40 {offsets = [0, 0], sizes = [1, 256], strides = [1, 1]} : vector<2x256xf32> to vector<1x256xf32>
    %42 = vector.extract_strided_slice %40 {offsets = [1, 0], sizes = [1, 256], strides = [1, 1]} : vector<2x256xf32> to vector<1x256xf32>
    %43 = arith.addf %41, %42 : vector<1x256xf32>
    %44 = tpu.reciprocal %43 : vector<1x256xf32> -> vector<1x256xf32>
    %45 = arith.mulf %33, %44 : vector<1x256xf32>
    %cst_28 = arith.constant 0.00999999977 : f32
    %46 = vector.broadcast %cst_28 : f32 to vector<1x256xf32>
    %47 = arith.mulf %45, %46 : vector<1x256xf32>
    %c0_29 = arith.constant 0 : index
    %c0_30 = arith.constant 0 : index
    %48 = vector.load %arg13[%c0_29, %c0_30] : memref<8x256xf32, #tpu.memory_space<vmem>>, vector<1x256xf32>
    tpu.vector_store %arg13[%c0_29, %c0_30], %33 {strides = array<i32>} : memref<8x256xf32, #tpu.memory_space<vmem>>, vector<1x256xf32>,
    %c1 = arith.constant 1 : index
    %c0_31 = arith.constant 0 : index
    %49 = vector.load %arg13[%c1, %c0_31] : memref<8x256xf32, #tpu.memory_space<vmem>>, vector<1x256xf32>
    tpu.vector_store %arg13[%c1, %c0_31], %44 {strides = array<i32>} : memref<8x256xf32, #tpu.memory_space<vmem>>, vector<1x256xf32>,
    %c2 = arith.constant 2 : index
    %c0_32 = arith.constant 0 : index
    %50 = vector.load %arg13[%c2, %c0_32] : memref<8x256xf32, #tpu.memory_space<vmem>>, vector<1x256xf32>
    tpu.vector_store %arg13[%c2, %c0_32], %47 {strides = array<i32>} : memref<8x256xf32, #tpu.memory_space<vmem>>, vector<1x256xf32>,
    %cst_33 = arith.constant 1.000000e+00 : f32
    %51 = vector.broadcast %cst_33 : f32 to vector<1x256xf32>
    %c3 = arith.constant 3 : index
    %c0_34 = arith.constant 0 : index
    %52 = vector.load %arg13[%c3, %c0_34] : memref<8x256xf32, #tpu.memory_space<vmem>>, vector<1x256xf32>
    tpu.vector_store %arg13[%c3, %c0_34], %51 {strides = array<i32>} : memref<8x256xf32, #tpu.memory_space<vmem>>, vector<1x256xf32>,
    %cst_35 = arith.constant 0.000000e+00 : f32
    %53 = vector.broadcast %cst_35 : f32 to vector<4x256xf32>
    %c4 = arith.constant 4 : index
    %c0_36 = arith.constant 0 : index
    %54 = vector.load %arg13[%c4, %c0_36] : memref<8x256xf32, #tpu.memory_space<vmem>>, vector<4x256xf32>
    tpu.vector_store %arg13[%c4, %c0_36], %53 {strides = array<i32>} : memref<8x256xf32, #tpu.memory_space<vmem>>, vector<4x256xf32>,
    %c0_37 = arith.constant 0 : index
    %c0_38 = arith.constant 0 : index
    %55 = vector.load %arg9[%c0_37, %c0_38] : memref<10x8xf32, #tpu.memory_space<vmem>>, vector<10x8xf32>
    %c0_39 = arith.constant 0 : index
    %c0_40 = arith.constant 0 : index
    %56 = vector.load %arg13[%c0_39, %c0_40] : memref<8x256xf32, #tpu.memory_space<vmem>>, vector<8x256xf32>
    %cst_41 = arith.constant dense<0.000000e+00> : vector<10x256xf32>
    %57 = tpu.matmul %55, %56, %cst_41 {dimension_numbers = #tpu.dot_dimension_numbers<[1], [0], [0], [1], [0, 0, 1, 1], [], []>} : vector<10x8xf32>, vector<8x256xf32>, vector<10x256xf32> -> vector<10x256xf32>
    %cst_42 = arith.constant 0.000000e+00 : f32
    %58 = vector.broadcast %cst_42 : f32 to vector<10x256xf32>
    %59 = arith.maximumf %57, %58 : vector<10x256xf32>
    %c0_43 = arith.constant 0 : index
    %c0_44 = arith.constant 0 : index
    %60 = vector.load %arg10[%c0_43, %c0_44] : memref<10x10xf32, #tpu.memory_space<vmem>>, vector<10x10xf32>
    %cst_45 = arith.constant dense<0.000000e+00> : vector<10x256xf32>
    %61 = tpu.matmul %60, %59, %cst_45 {dimension_numbers = #tpu.dot_dimension_numbers<[1], [0], [0], [1], [0, 0, 1, 1], [], []>} : vector<10x10xf32>, vector<10x256xf32>, vector<10x256xf32> -> vector<10x256xf32>
    %cst_46 = arith.constant 0.000000e+00 : f32
    %62 = vector.broadcast %cst_46 : f32 to vector<10x256xf32>
    %63 = arith.maximumf %61, %62 : vector<10x256xf32>
    %c0_47 = arith.constant 0 : index
    %c0_48 = arith.constant 0 : index
    %64 = vector.load %arg11[%c0_47, %c0_48] : memref<1x10xf32, #tpu.memory_space<vmem>>, vector<1x10xf32>
    %cst_49 = arith.constant dense<0.000000e+00> : vector<1x256xf32>
    %65 = tpu.matmul %64, %63, %cst_49 {dimension_numbers = #tpu.dot_dimension_numbers<[1], [0], [0], [1], [0, 0, 1, 1], [], []>} : vector<1x10xf32>, vector<10x256xf32>, vector<1x256xf32> -> vector<1x256xf32>
    %cst_50 = arith.constant 5.000000e-01 : f32
    %66 = vector.broadcast %cst_50 : f32 to vector<1x256xf32>
    %67 = arith.mulf %66, %65 : vector<1x256xf32>
    %68 = math.tanh %67 : vector<1x256xf32>
    %cst_51 = arith.constant 5.000000e-01 : f32
    %69 = vector.broadcast %cst_51 : f32 to vector<1x256xf32>
    %70 = arith.mulf %69, %68 : vector<1x256xf32>
    %cst_52 = arith.constant 5.000000e-01 : f32
    %71 = vector.broadcast %cst_52 : f32 to vector<1x256xf32>
    %72 = arith.addf %70, %71 : vector<1x256xf32>
    %cst_53 = arith.constant 8.500000e-01 : f32
    %73 = vector.broadcast %cst_53 : f32 to vector<1x256xf32>
    %74 = arith.mulf %73, %72 : vector<1x256xf32>
    %cst_54 = arith.constant 1.500000e-01 : f32
    %75 = vector.broadcast %cst_54 : f32 to vector<1x256xf32>
    %76 = arith.mulf %75, %33 : vector<1x256xf32>
    %77 = arith.addf %74, %76 : vector<1x256xf32>
    %78 = vector.shape_cast %77 : vector<1x256xf32> to vector<1x1x256xf32>
    %c0_55 = arith.constant 0 : index
    %c0_56 = arith.constant 0 : index
    %c0_57 = arith.constant 0 : index
    %79 = vector.load %arg12[%c0_55, %c0_56, %c0_57] : memref<1x1x256xf32, #tpu.memory_space<vmem>>, vector<1x1x256xf32>
    tpu.vector_store %arg12[%c0_55, %c0_56, %c0_57], %78 {strides = array<i32>} : memref<1x1x256xf32, #tpu.memory_space<vmem>>, vector<1x1x256xf32>,
    return
  }
  func.func @transform_0(%arg0: i32) -> (i32, i32) {
    %c0_i32 = arith.constant 0 : i32
    %c0_i32_0 = arith.constant 0 : i32
    return %c0_i32, %arg0 : i32, i32
  }
  func.func @transform_1(%arg0: i32) -> (i32, i32) {
    %c0_i32 = arith.constant 0 : i32
    %c0_i32_0 = arith.constant 0 : i32
    %c0_i32_1 = arith.constant 0 : i32
    return %c0_i32, %c0_i32_0 : i32, i32
  }
  func.func @transform_2(%arg0: i32) -> (i32, i32) {
    %c0_i32 = arith.constant 0 : i32
    %c0_i32_0 = arith.constant 0 : i32
    %c0_i32_1 = arith.constant 0 : i32
    return %c0_i32, %c0_i32_0 : i32, i32
  }
  func.func @transform_3(%arg0: i32) -> (i32, i32) {
    %c0_i32 = arith.constant 0 : i32
    %c0_i32_0 = arith.constant 0 : i32
    %c0_i32_1 = arith.constant 0 : i32
    return %c0_i32, %c0_i32_0 : i32, i32
  }
  func.func @transform_4(%arg0: i32) -> (i32, i32) {
    %c0_i32 = arith.constant 0 : i32
    %c0_i32_0 = arith.constant 0 : i32
    %c0_i32_1 = arith.constant 0 : i32
    return %c0_i32, %c0_i32_0 : i32, i32
  }
  func.func @transform_5(%arg0: i32) -> (i32, i32) {
    %c0_i32 = arith.constant 0 : i32
    %c0_i32_0 = arith.constant 0 : i32
    %c0_i32_1 = arith.constant 0 : i32
    return %c0_i32, %c0_i32_0 : i32, i32
  }
  func.func @transform_6(%arg0: i32) -> (i32, i32) {
    %c0_i32 = arith.constant 0 : i32
    %c0_i32_0 = arith.constant 0 : i32
    %c0_i32_1 = arith.constant 0 : i32
    return %c0_i32, %c0_i32_0 : i32, i32
  }
  func.func @transform_7(%arg0: i32) -> (i32, i32) {
    %c0_i32 = arith.constant 0 : i32
    %c0_i32_0 = arith.constant 0 : i32
    %c0_i32_1 = arith.constant 0 : i32
    return %c0_i32, %c0_i32_0 : i32, i32
  }
  func.func @transform_8(%arg0: i32) -> (i32, i32) {
    %c0_i32 = arith.constant 0 : i32
    %c0_i32_0 = arith.constant 0 : i32
    %c0_i32_1 = arith.constant 0 : i32
    return %c0_i32, %c0_i32_0 : i32, i32
  }
  func.func @transform_9(%arg0: i32) -> (i32, i32) {
    %c0_i32 = arith.constant 0 : i32
    %c0_i32_0 = arith.constant 0 : i32
    %c0_i32_1 = arith.constant 0 : i32
    return %c0_i32, %c0_i32_0 : i32, i32
  }
  func.func @transform_10(%arg0: i32) -> (i32, i32) {
    %c0_i32 = arith.constant 0 : i32
    %c0_i32_0 = arith.constant 0 : i32
    %c0_i32_1 = arith.constant 0 : i32
    return %c0_i32, %c0_i32_0 : i32, i32
  }
  func.func @transform_11(%arg0: i32) -> (i32, i32, i32) {
    %c0_i32 = arith.constant 0 : i32
    %c0_i32_0 = arith.constant 0 : i32
    %c0_i32_1 = arith.constant 0 : i32
    return %arg0, %c0_i32, %c0_i32_0 : i32, i32, i32
  }
}

</mosaic_0001>

<llo_original>
// kernel: tpu_custom_call.1
$region0: #{tpu_custom_call.1}
  #allocation0 [shape = 'u32[]', space=smem, size = 0x4, offset = 0x4, fixed_abs, tag = 'smem constant byte address 0x4 - core index']
  #allocation1 [shape = 'u32[144,128]{1,0:T(1,128)}', space=vmem, size = 0x12000, scoped, tag = 'internal scratch']
  #allocation2 [shape = 'f32[8,256]{1,0:T(8,128)}', space=vmem, size = 0x2000, scoped, tag = 'scratch operand']
  %s0 = inlined_call_operand.vmem [shape: f32[51,512], index: 0, kind: input, shape index: {}]
  %s1 = inlined_call_operand.vmem [shape: f32[16,33], index: 1, kind: input, shape index: {}]
  %s2 = inlined_call_operand.vmem [shape: f32[128,17], index: 2, kind: input, shape index: {}]
  %s3 = inlined_call_operand.vmem [shape: f32[128,16], index: 3, kind: input, shape index: {}]
  %s4 = inlined_call_operand.vmem [shape: f32[128,128], index: 4, kind: input, shape index: {}]
  %s5 = inlined_call_operand.vmem [shape: f32[128,1], index: 5, kind: input, shape index: {}]
  %s6 = inlined_call_operand.vmem [shape: f32[2,128], index: 6, kind: input, shape index: {}]
  %s7 = inlined_call_operand.vmem [shape: f32[2,1], index: 7, kind: input, shape index: {}]
  %s8 = inlined_call_operand.vmem [shape: f32[10,8], index: 8, kind: input, shape index: {}]
  %s9 = inlined_call_operand.vmem [shape: f32[10,10], index: 9, kind: input, shape index: {}]
  %s10 = inlined_call_operand.vmem [shape: f32[1,10], index: 10, kind: input, shape index: {}]
  %s11 = inlined_call_operand.hbm [shape: f32[2,1,256], index: 11, kind: output, shape index: {}]
  %s12 = sld [smem:[#allocation0]]
  $region100: #{tpu_custom_call.1} parent=0
    _
  %s14 = ssub.s32 1, %s12
  %s15 = scalar_select 0, %s14, %s12
  $region1: #{tpu_custom_call.1} parent=0
    #allocation3 [shape = 'u8[114688]{0}', space=vmem, size = 0x1c000, scoped, tag = 'input window, operand 0']
    #allocation4 [shape = 'u8[2048]{0}', space=vmem, size = 0x800, scoped, tag = 'output window, operand 0']
    #allocation5 [shape = 's32[2]{0}', space=sflag, size = 0x8, scoped, tag = 'scoped memory for tpu_custom_call.1']
    %16 = vsyncpa [#allocation5], 0
    %s17 = scalar_lea.sflag [#allocation5], 1
    %18 = vsyncpa %s17, 0
    loop: start=0, step=1, limit=4
    $region2: #{tpu_custom_call.1} parent=1 // loop_pre_header
      _
    $region3: #{tpu_custom_call.1} parent=1 // loop_header
      %s20 = sphi 0, %s24
      %p21 = scmp.ge.s32.totalorder %s20, 4
      %s30 = sphi 0, %s32
      %s33 = sphi 0, %s30
      %s34 = sphi 0, %s33
      %s50 = sphi 0, %s34
      %s54 = sphi 0, %s54
      %s56 = sphi 0, %s54
      %s57 = sphi 0, %s56
      %s71 = sphi 0, %s57
      %s75 = sphi 0, %s75
      %s77 = sphi 0, %s75
      %s78 = sphi 0, %s77
      %s92 = sphi 0, %s78
      %s96 = sphi 0, %s96
      %s98 = sphi 0, %s96
      %s99 = sphi 0, %s98
      %s113 = sphi 0, %s99
      %s117 = sphi 0, %s117
      %s119 = sphi 0, %s117
      %s120 = sphi 0, %s119
      %s134 = sphi 0, %s120
      %s138 = sphi 0, %s138
      %s140 = sphi 0, %s138
      %s141 = sphi 0, %s140
      %s155 = sphi 0, %s141
      %s159 = sphi 0, %s159
      %s161 = sphi 0, %s159
      %s162 = sphi 0, %s161
      %s176 = sphi 0, %s162
      %s180 = sphi 0, %s180
      %s182 = sphi 0, %s180
      %s183 = sphi 0, %s182
      %s197 = sphi 0, %s183
      %s201 = sphi 0, %s201
      %s203 = sphi 0, %s201
      %s204 = sphi 0, %s203
      %s218 = sphi 0, %s204
      %s222 = sphi 0, %s222
      %s224 = sphi 0, %s222
      %s225 = sphi 0, %s224
      %s239 = sphi 0, %s225
      %s243 = sphi 0, %s243
      %s245 = sphi 0, %s243
      %s246 = sphi 0, %s245
      %s260 = sphi 0, %s246
      %s266 = sphi 0, %s268
      %s269 = sphi 0, %s266
      %s270 = sphi 0, %s269
      %s286 = sphi 0, %s270
    $region4: #{tpu_custom_call.1} parent=1 // loop_header_branch
      %23 = sbr.rel (%p21) target = $region8
    $region5: #{tpu_custom_call.1} parent=1 // loop_body
      %s25 = ssub.s32 %s20, 1
      %s26 = ssub.s32 %s20, 2
      %s27 = sadd.s32 %s20, 1
      %s28 = ssub.s32 %s20, %s27
      %p29 = scmp.eq.s32.totalorder %s28, 0
      %s31 = sadd.s32 %s30, 1
      %s32 = scalar_select %p29, %s30, %s31
      %p35 = pneg %p29
      %p36 = scmp.eq.s32.totalorder %s20, 1
      %p37 = por %p35, %p36
      %p38 = scmp.ne.s32.totalorder %s30, %s33
      %p39 = scmp.eq.s32.totalorder %s20, 0
      %p40 = por %p38, %p39
      %p41 = scmp.ne.s32.totalorder %s30, %s33
      %p42 = scmp.eq.s32.totalorder %s25, 1
      %p43 = por %p41, %p42
      %p44 = scmp.ne.s32.totalorder %s33, %s34
      %p45 = scmp.eq.s32.totalorder %s25, 0
      %p46 = por %p44, %p45
      %p47 = scmp.ne.s32.totalorder %s33, %s34
      %p48 = scmp.eq.s32.totalorder %s26, 1
      %p49 = por %p47, %p48
      %p51 = scmp.ne.s32.totalorder %s34, %s50
      %p52 = scmp.eq.s32.totalorder %s26, 0
      %p53 = por %p51, %p52
      %s55 = sadd.s32 %s54, 1
      %p58 = scmp.eq.s32.totalorder %s20, 1
      %p59 = scmp.ne.s32.totalorder %s54, %s56
      %p60 = scmp.eq.s32.totalorder %s20, 0
      %p61 = por %p59, %p60
      %p62 = scmp.ne.s32.totalorder %s54, %s56
      %p63 = scmp.eq.s32.totalorder %s25, 1
      %p64 = por %p62, %p63
      %p65 = scmp.ne.s32.totalorder %s56, %s57
      %p66 = scmp.eq.s32.totalorder %s25, 0
      %p67 = por %p65, %p66
      %p68 = scmp.ne.s32.totalorder %s56, %s57
      %p69 = scmp.eq.s32.totalorder %s26, 1
      %p70 = por %p68, %p69
      %p72 = scmp.ne.s32.totalorder %s57, %s71
      %p73 = scmp.eq.s32.totalorder %s26, 0
      %p74 = por %p72, %p73
      %s76 = sadd.s32 %s75, 1
      %p79 = scmp.eq.s32.totalorder %s20, 1
      %p80 = scmp.ne.s32.totalorder %s75, %s77
      %p81 = scmp.eq.s32.totalorder %s20, 0
      %p82 = por %p80, %p81
      %p83 = scmp.ne.s32.totalorder %s75, %s77
      %p84 = scmp.eq.s32.totalorder %s25, 1
      %p85 = por %p83, %p84
      %p86 = scmp.ne.s32.totalorder %s77, %s78
      %p87 = scmp.eq.s32.totalorder %s25, 0
      %p88 = por %p86, %p87
      %p89 = scmp.ne.s32.totalorder %s77, %s78
      %p90 = scmp.eq.s32.totalorder %s26, 1
      %p91 = por %p89, %p90
      %p93 = scmp.ne.s32.totalorder %s78, %s92
      %p94 = scmp.eq.s32.totalorder %s26, 0
      %p95 = por %p93, %p94
      %s97 = sadd.s32 %s96, 1
      %p100 = scmp.eq.s32.totalorder %s20, 1
      %p101 = scmp.ne.s32.totalorder %s96, %s98
      %p102 = scmp.eq.s32.totalorder %s20, 0
      %p103 = por %p101, %p102
      %p104 = scmp.ne.s32.totalorder %s96, %s98
      %p105 = scmp.eq.s32.totalorder %s25, 1
      %p106 = por %p104, %p105
      %p107 = scmp.ne.s32.totalorder %s98, %s99
      %p108 = scmp.eq.s32.totalorder %s25, 0
      %p109 = por %p107, %p108
      %p110 = scmp.ne.s32.totalorder %s98, %s99
      %p111 = scmp.eq.s32.totalorder %s26, 1
      %p112 = por %p110, %p111
      %p114 = scmp.ne.s32.totalorder %s99, %s113
      %p115 = scmp.eq.s32.totalorder %s26, 0
      %p116 = por %p114, %p115
      %s118 = sadd.s32 %s117, 1
      %p121 = scmp.eq.s32.totalorder %s20, 1
      %p122 = scmp.ne.s32.totalorder %s117, %s119
      %p123 = scmp.eq.s32.totalorder %s20, 0
      %p124 = por %p122, %p123
      %p125 = scmp.ne.s32.totalorder %s117, %s119
      %p126 = scmp.eq.s32.totalorder %s25, 1
      %p127 = por %p125, %p126
      %p128 = scmp.ne.s32.totalorder %s119, %s120
      %p129 = scmp.eq.s32.totalorder %s25, 0
      %p130 = por %p128, %p129
      %p131 = scmp.ne.s32.totalorder %s119, %s120
      %p132 = scmp.eq.s32.totalorder %s26, 1
      %p133 = por %p131, %p132
      %p135 = scmp.ne.s32.totalorder %s120, %s134
      %p136 = scmp.eq.s32.totalorder %s26, 0
      %p137 = por %p135, %p136
      %s139 = sadd.s32 %s138, 1
      %p142 = scmp.eq.s32.totalorder %s20, 1
      %p143 = scmp.ne.s32.totalorder %s138, %s140
      %p144 = scmp.eq.s32.totalorder %s20, 0
      %p145 = por %p143, %p144
      %p146 = scmp.ne.s32.totalorder %s138, %s140
      %p147 = scmp.eq.s32.totalorder %s25, 1
      %p148 = por %p146, %p147
      %p149 = scmp.ne.s32.totalorder %s140, %s141
      %p150 = scmp.eq.s32.totalorder %s25, 0
      %p151 = por %p149, %p150
      %p152 = scmp.ne.s32.totalorder %s140, %s141
      %p153 = scmp.eq.s32.totalorder %s26, 1
      %p154 = por %p152, %p153
      %p156 = scmp.ne.s32.totalorder %s141, %s155
      %p157 = scmp.eq.s32.totalorder %s26, 0
      %p158 = por %p156, %p157
      %s160 = sadd.s32 %s159, 1
      %p163 = scmp.eq.s32.totalorder %s20, 1
      %p164 = scmp.ne.s32.totalorder %s159, %s161
      %p165 = scmp.eq.s32.totalorder %s20, 0
      %p166 = por %p164, %p165
      %p167 = scmp.ne.s32.totalorder %s159, %s161
      %p168 = scmp.eq.s32.totalorder %s25, 1
      %p169 = por %p167, %p168
      %p170 = scmp.ne.s32.totalorder %s161, %s162
      %p171 = scmp.eq.s32.totalorder %s25, 0
      %p172 = por %p170, %p171
      %p173 = scmp.ne.s32.totalorder %s161, %s162
      %p174 = scmp.eq.s32.totalorder %s26, 1
      %p175 = por %p173, %p174
      %p177 = scmp.ne.s32.totalorder %s162, %s176
      %p178 = scmp.eq.s32.totalorder %s26, 0
      %p179 = por %p177, %p178
      %s181 = sadd.s32 %s180, 1
      %p184 = scmp.eq.s32.totalorder %s20, 1
      %p185 = scmp.ne.s32.totalorder %s180, %s182
      %p186 = scmp.eq.s32.totalorder %s20, 0
      %p187 = por %p185, %p186
      %p188 = scmp.ne.s32.totalorder %s180, %s182
      %p189 = scmp.eq.s32.totalorder %s25, 1
      %p190 = por %p188, %p189
      %p191 = scmp.ne.s32.totalorder %s182, %s183
      %p192 = scmp.eq.s32.totalorder %s25, 0
      %p193 = por %p191, %p192
      %p194 = scmp.ne.s32.totalorder %s182, %s183
      %p195 = scmp.eq.s32.totalorder %s26, 1
      %p196 = por %p194, %p195
      %p198 = scmp.ne.s32.totalorder %s183, %s197
      %p199 = scmp.eq.s32.totalorder %s26, 0
      %p200 = por %p198, %p199
      %s202 = sadd.s32 %s201, 1
      %p205 = scmp.eq.s32.totalorder %s20, 1
      %p206 = scmp.ne.s32.totalorder %s201, %s203
      %p207 = scmp.eq.s32.totalorder %s20, 0
      %p208 = por %p206, %p207
      %p209 = scmp.ne.s32.totalorder %s201, %s203
      %p210 = scmp.eq.s32.totalorder %s25, 1
      %p211 = por %p209, %p210
      %p212 = scmp.ne.s32.totalorder %s203, %s204
      %p213 = scmp.eq.s32.totalorder %s25, 0
      %p214 = por %p212, %p213
      %p215 = scmp.ne.s32.totalorder %s203, %s204
      %p216 = scmp.eq.s32.totalorder %s26, 1
      %p217 = por %p215, %p216
      %p219 = scmp.ne.s32.totalorder %s204, %s218
      %p220 = scmp.eq.s32.totalorder %s26, 0
      %p221 = por %p219, %p220
      %s223 = sadd.s32 %s222, 1
      %p226 = scmp.eq.s32.totalorder %s20, 1
      %p227 = scmp.ne.s32.totalorder %s222, %s224
      %p228 = scmp.eq.s32.totalorder %s20, 0
      %p229 = por %p227, %p228
      %p230 = scmp.ne.s32.totalorder %s222, %s224
      %p231 = scmp.eq.s32.totalorder %s25, 1
      %p232 = por %p230, %p231
      %p233 = scmp.ne.s32.totalorder %s224, %s225
      %p234 = scmp.eq.s32.totalorder %s25, 0
      %p235 = por %p233, %p234
      %p236 = scmp.ne.s32.totalorder %s224, %s225
      %p237 = scmp.eq.s32.totalorder %s26, 1
      %p238 = por %p236, %p237
      %p240 = scmp.ne.s32.totalorder %s225, %s239
      %p241 = scmp.eq.s32.totalorder %s26, 0
      %p242 = por %p240, %p241
      %s244 = sadd.s32 %s243, 1
      %p247 = scmp.eq.s32.totalorder %s20, 1
      %p248 = scmp.ne.s32.totalorder %s243, %s245
      %p249 = scmp.eq.s32.totalorder %s20, 0
      %p250 = por %p248, %p249
      %p251 = scmp.ne.s32.totalorder %s243, %s245
      %p252 = scmp.eq.s32.totalorder %s25, 1
      %p253 = por %p251, %p252
      %p254 = scmp.ne.s32.totalorder %s245, %s246
      %p255 = scmp.eq.s32.totalorder %s25, 0
      %p256 = por %p254, %p255
      %p257 = scmp.ne.s32.totalorder %s245, %s246
      %p258 = scmp.eq.s32.totalorder %s26, 1
      %p259 = por %p257, %p258
      %p261 = scmp.ne.s32.totalorder %s246, %s260
      %p262 = scmp.eq.s32.totalorder %s26, 0
      %p263 = por %p261, %p262
      %s264 = ssub.s32 %s20, %s27
      %p265 = scmp.eq.s32.totalorder %s264, 0
      %s267 = sadd.s32 %s266, 1
      %s268 = scalar_select %p265, %s266, %s267
      %p271 = pneg %p265
      %p272 = scmp.eq.s32.totalorder %s20, 1
      %p273 = por %p271, %p272
      %p274 = scmp.ne.s32.totalorder %s266, %s269
      %p275 = scmp.eq.s32.totalorder %s20, 0
      %p276 = por %p274, %p275
      %p277 = scmp.ne.s32.totalorder %s266, %s269
      %p278 = scmp.eq.s32.totalorder %s25, 1
      %p279 = por %p277, %p278
      %p280 = scmp.ne.s32.totalorder %s269, %s270
      %p281 = scmp.eq.s32.totalorder %s25, 0
      %p282 = por %p280, %p281
      %p283 = scmp.ne.s32.totalorder %s269, %s270
      %p284 = scmp.eq.s32.totalorder %s26, 1
      %p285 = por %p283, %p284
      %p287 = scmp.ne.s32.totalorder %s270, %s286
      %p288 = scmp.eq.s32.totalorder %s26, 0
      %p289 = por %p287, %p288
      %p290 = scmp.le.s32.totalorder 1, %s20
      %p291 = scmp.lt.s32.totalorder %s20, 3
      %p292 = pnand %p290, %p291
      %p293 = pneg %p292
      // Predicated region
      $region9: #{tpu_custom_call.1} parent=5 // pred_check
        _
      $region10: #{tpu_custom_call.1} parent=5 // pred_check_branch
        %295 = sbr.rel (%p292) target = $region12
      $region11: #{tpu_custom_call.1} parent=5 // pred_region
        %s296 = ssub.s32 %s20, 1
        // Predicated region
        $region13: #{tpu_custom_call.1} parent=11 // pred_check
          %p297 = pneg %p67
        $region14: #{tpu_custom_call.1} parent=11 // pred_check_branch
          %299 = sbr.rel (%p297) target = $region16
        $region15: #{tpu_custom_call.1} parent=11 // pred_region
          _
        $region16: #{tpu_custom_call.1} parent=11 // pred_fallthru
          _
        // Predicated region
        $region17: #{tpu_custom_call.1} parent=11 // pred_check
          %p300 = pneg %p88
        $region18: #{tpu_custom_call.1} parent=11 // pred_check_branch
          %302 = sbr.rel (%p300) target = $region20
        $region19: #{tpu_custom_call.1} parent=11 // pred_region
          _
        $region20: #{tpu_custom_call.1} parent=11 // pred_fallthru
          _
        // Predicated region
        $region21: #{tpu_custom_call.1} parent=11 // pred_check
          %p303 = pneg %p109
        $region22: #{tpu_custom_call.1} parent=11 // pred_check_branch
          %305 = sbr.rel (%p303) target = $region24
        $region23: #{tpu_custom_call.1} parent=11 // pred_region
          _
        $region24: #{tpu_custom_call.1} parent=11 // pred_fallthru
          _
        // Predicated region
        $region25: #{tpu_custom_call.1} parent=11 // pred_check
          %p306 = pneg %p130
        $region26: #{tpu_custom_call.1} parent=11 // pred_check_branch
          %308 = sbr.rel (%p306) target = $region28
        $region27: #{tpu_custom_call.1} parent=11 // pred_region
          _
        $region28: #{tpu_custom_call.1} parent=11 // pred_fallthru
          _
        // Predicated region
        $region29: #{tpu_custom_call.1} parent=11 // pred_check
          %p309 = pneg %p151
        $region30: #{tpu_custom_call.1} parent=11 // pred_check_branch
          %311 = sbr.rel (%p309) target = $region32
        $region31: #{tpu_custom_call.1} parent=11 // pred_region
          _
        $region32: #{tpu_custom_call.1} parent=11 // pred_fallthru
          _
        // Predicated region
        $region33: #{tpu_custom_call.1} parent=11 // pred_check
          %p312 = pneg %p172
        $region34: #{tpu_custom_call.1} parent=11 // pred_check_branch
          %314 = sbr.rel (%p312) target = $region36
        $region35: #{tpu_custom_call.1} parent=11 // pred_region
          _
        $region36: #{tpu_custom_call.1} parent=11 // pred_fallthru
          _
        // Predicated region
        $region37: #{tpu_custom_call.1} parent=11 // pred_check
          %p315 = pneg %p193
        $region38: #{tpu_custom_call.1} parent=11 // pred_check_branch
          %317 = sbr.rel (%p315) target = $region40
        $region39: #{tpu_custom_call.1} parent=11 // pred_region
          _
        $region40: #{tpu_custom_call.1} parent=11 // pred_fallthru
          _
        // Predicated region
        $region41: #{tpu_custom_call.1} parent=11 // pred_check
          %p318 = pneg %p214
        $region42: #{tpu_custom_call.1} parent=11 // pred_check_branch
          %320 = sbr.rel (%p318) target = $region44
        $region43: #{tpu_custom_call.1} parent=11 // pred_region
          _
        $region44: #{tpu_custom_call.1} parent=11 // pred_fallthru
          _
        // Predicated region
        $region45: #{tpu_custom_call.1} parent=11 // pred_check
          %p321 = pneg %p235
        $region46: #{tpu_custom_call.1} parent=11 // pred_check_branch
          %323 = sbr.rel (%p321) target = $region48
        $region47: #{tpu_custom_call.1} parent=11 // pred_region
          _
        $region48: #{tpu_custom_call.1} parent=11 // pred_fallthru
          _
        // Predicated region
        $region49: #{tpu_custom_call.1} parent=11 // pred_check
          %p324 = pneg %p256
        $region50: #{tpu_custom_call.1} parent=11 // pred_check_branch
          %326 = sbr.rel (%p324) target = $region52
        $region51: #{tpu_custom_call.1} parent=11 // pred_region
          _
        $region52: #{tpu_custom_call.1} parent=11 // pred_fallthru
          _
      $region12: #{tpu_custom_call.1} parent=5 // pred_fallthru
        _
      %p327 = scmp.lt.s32.totalorder %s20, 2
      // Predicated region
      $region53: #{tpu_custom_call.1} parent=5 // pred_check
        %p328 = pneg %p327
      $region54: #{tpu_custom_call.1} parent=5 // pred_check_branch
        %330 = sbr.rel (%p328) target = $region56
      $region55: #{tpu_custom_call.1} parent=5 // pred_region
        // Predicated region
        $region57: #{tpu_custom_call.1} parent=55 // pred_check
          %p331 = pneg %p40
        $region58: #{tpu_custom_call.1} parent=55 // pred_check_branch
          %333 = sbr.rel (%p331) target = $region60
        $region59: #{tpu_custom_call.1} parent=55 // pred_region
          %s334 = sand.u32 %s30, 1
          %s335 = sand.u32 %s30, 1
          %s336 = smul.addr %s335, 112
          %s337 = scalar_lea.vmem [#allocation3], %s336
          %s338 = smul.u32 2, %s20
          %s339 = smul.addr %s338, 8
          %s340 = scalar_lea.vmem %s0, %s339
          // Predicated region
          $region61: #{tpu_custom_call.1} parent=59 // pred_check
            _
          $region62: #{tpu_custom_call.1} parent=59 // pred_check_branch
            %342 = sbr.rel (0) target = $region64
          $region63: #{tpu_custom_call.1} parent=59 // pred_region
            // Predicated region
            $region65: #{tpu_custom_call.1} parent=63 // pred_check
              _
            $region66: #{tpu_custom_call.1} parent=63 // pred_check_branch
              %344 = sbr.rel (0) target = $region68
            $region67: #{tpu_custom_call.1} parent=63 // pred_region
              loop: start=0, step=1, limit=1
              $region69: #{tpu_custom_call.1} parent=67 // loop_pre_header
                _
              $region70: #{tpu_custom_call.1} parent=67 // loop_header
                %s346 = sphi 0, %s350
                %p347 = scmp.ge.s32.totalorder %s346, 1
                %s351 = sphi %s340, %s340
                %s352 = sphi %s337, %s337
              $region71: #{tpu_custom_call.1} parent=67 // loop_header_branch
                %349 = sbr.rel (%p347) target = $region75
              $region72: #{tpu_custom_call.1} parent=67 // loop_body
                %v353 = vld [vmem:[%s351] sm:$0xff]
                %354 = vst [vmem:[%s352] sm:$0xff] %v353
                %v355 = vld [vmem:[%s351 + $0x8] sm:$0xff]
                %356 = vst [vmem:[%s352 + $0x8] sm:$0xff] %v355
                %v357 = vld [vmem:[%s351 + $0x20] sm:$0xff]
                %358 = vst [vmem:[%s352 + $0x10] sm:$0xff] %v357
                %v359 = vld [vmem:[%s351 + $0x28] sm:$0xff]
                %360 = vst [vmem:[%s352 + $0x18] sm:$0xff] %v359
                %v361 = vld [vmem:[%s351 + $0x40] sm:$0xff]
                %362 = vst [vmem:[%s352 + $0x20] sm:$0xff] %v361
                %v363 = vld [vmem:[%s351 + $0x48] sm:$0xff]
                %364 = vst [vmem:[%s352 + $0x28] sm:$0xff] %v363
                %v365 = vld [vmem:[%s351 + $0x60] sm:$0xff]
                %366 = vst [vmem:[%s352 + $0x30] sm:$0xff] %v365
                %v367 = vld [vmem:[%s351 + $0x68] sm:$0xff]
                %368 = vst [vmem:[%s352 + $0x38] sm:$0xff] %v367
                %v369 = vld [vmem:[%s351 + $0x80] sm:$0xff]
                %370 = vst [vmem:[%s352 + $0x40] sm:$0xff] %v369
                %v371 = vld [vmem:[%s351 + $0x88] sm:$0xff]
                %372 = vst [vmem:[%s352 + $0x48] sm:$0xff] %v371
                %v373 = vld [vmem:[%s351 + $0xa0] sm:$0xff]
                %374 = vst [vmem:[%s352 + $0x50] sm:$0xff] %v373
                %v375 = vld [vmem:[%s351 + $0xa8] sm:$0xff]
                %376 = vst [vmem:[%s352 + $0x58] sm:$0xff] %v375
                %v377 = vld [vmem:[%s351 + $0xc0] sm:$0xff]
                %378 = vst [vmem:[%s352 + $0x60] sm:$0xff] %v377
                %v379 = vld [vmem:[%s351 + $0xc8] sm:$0xff]
                %380 = vst [vmem:[%s352 + $0x68] sm:$0xff] %v379
              $region73: #{tpu_custom_call.1} parent=67 // loop_footer
                %s350 = sadd.s32 1, %s346
              $region74: #{tpu_custom_call.1} parent=67 // loop_footer_branch
                %345 = sbr.rel target = $region70
              $region75: #{tpu_custom_call.1} parent=67 // loop_exit
                _
            $region68: #{tpu_custom_call.1} parent=63 // pred_fallthru
              _
            // Predicated region
            $region76: #{tpu_custom_call.1} parent=63 // pred_check
              _
            $region77: #{tpu_custom_call.1} parent=63 // pred_check_branch
              %382 = sbr.rel target = $region79
            $region78: #{tpu_custom_call.1} parent=63 // pred_region
              _
            $region79: #{tpu_custom_call.1} parent=63 // pred_fallthru
              _
          $region64: #{tpu_custom_call.1} parent=59 // pred_fallthru
            _
          %383 = vnop
        $region60: #{tpu_custom_call.1} parent=55 // pred_fallthru
          _
      $region56: #{tpu_custom_call.1} parent=5 // pred_fallthru
        _
      %p384 = scmp.le.s32.totalorder 1, %s20
      %p385 = scmp.lt.s32.totalorder %s20, 3
      %p386 = pnand %p384, %p385
      %p387 = pneg %p386
      // Predicated region
      $region80: #{tpu_custom_call.1} parent=5 // pred_check
        _
      $region81: #{tpu_custom_call.1} parent=5 // pred_check_branch
        %389 = sbr.rel (%p386) target = $region83
      $region82: #{tpu_custom_call.1} parent=5 // pred_region
        %s390 = ssub.s32 %s20, 1
        %s391 = sand.u32 %s33, 1
        %s392 = sand.u32 %s33, 1
        %s393 = smul.addr %s392, 112
        %s394 = scalar_lea.vmem [#allocation3], %s393
        // Predicated region
        $region84: #{tpu_custom_call.1} parent=82 // pred_check
          %p395 = pneg %p46
        $region85: #{tpu_custom_call.1} parent=82 // pred_check_branch
          %397 = sbr.rel (%p395) target = $region87
        $region86: #{tpu_custom_call.1} parent=82 // pred_region
          _
        $region87: #{tpu_custom_call.1} parent=82 // pred_fallthru
          _
        %s398 = sand.u32 %s33, 1
        %s399 = sand.u32 %s33, 1
        %s400 = smul.addr %s399, 112
        %s401 = scalar_lea.vmem [#allocation3], %s400
        %p402 = pneg %p46
        %p403 = pneg %p43
        %p404 = pneg %p67
        %p405 = pneg %p64
        %p406 = pneg %p88
        %p407 = pneg %p85
        %p408 = pneg %p109
        %p409 = pneg %p106
        %p410 = pneg %p130
        %p411 = pneg %p127
        %p412 = pneg %p151
        %p413 = pneg %p148
        %p414 = pneg %p172
        %p415 = pneg %p169
        %p416 = pneg %p193
        %p417 = pneg %p190
        %p418 = pneg %p214
        %p419 = pneg %p211
        %p420 = pneg %p235
        %p421 = pneg %p232
        %p422 = pneg %p256
        %p423 = pneg %p253
        %p424 = pneg %p282
        %p425 = pneg %p279
        %s426 = sand.u32 %s269, 1
        %s427 = scalar_lea.sflag [#allocation5], %s426
        %s428 = sand.u32 %s269, 1
        %s429 = smul.addr %s428, 2
        %s430 = scalar_lea.vmem [#allocation4], %s429
        %s431 = smul.u32 2, %s25
        %v432 = vld [vmem:[%s394] sm:$0xff]
        %v433 = vld [vmem:[%s394 + $0x8] sm:$0xff]
        %v434 = vld [vmem:[%s394 + $0x10] sm:$0xff]
        %v435 = vld [vmem:[%s394 + $0x18] sm:$0xff]
        %v436 = vld [vmem:[%s394 + $0x20] sm:$0x1]
        %v437 = vld [vmem:[%s394 + $0x28] sm:$0x1]
        %v438 = vld [vmem:[%s394 + $0x20] sm:$0xff]
        %v439 = vld [vmem:[%s394 + $0x28] sm:$0xff]
        %v440 = vld [vmem:[%s394 + $0x30] sm:$0xff]
        %v441 = vld [vmem:[%s394 + $0x38] sm:$0xff]
        %v442 = vld [vmem:[%s394 + $0x40] sm:$0xff]
        %v443 = vld [vmem:[%s394 + $0x48] sm:$0xff]
        %v444 = vld [vmem:[%s394 + $0x50] sm:$0xff]
        %v445 = vld [vmem:[%s394 + $0x58] sm:$0xff]
        %v446 = vld [vmem:[%s394 + $0x60] sm:$0x1]
        %v447 = vld [vmem:[%s394 + $0x68] sm:$0x1]
        %v448 = vld [vmem:[%s394 + $0x60] sm:$0x6]
        %v449 = vld [vmem:[%s394 + $0x68] sm:$0x6]
        %v450 = vld [vmem:[%s1] sm:$0xff]
        %v451 = vld [vmem:[%s1 + $0x8] sm:$0xff]
        %vm452 = vcmask 269312
        %v454 = vsel %vm452, %v450, 0
        %v457 = vsel %vm452, %v451, 0
        %vm459 = vcmask 1040384
        %v461 = vsel %vm459, %v446, 0
        %v464 = vsel %vm459, %v447, 0
        %466 = vmatprep.subr.mxu0 %v439
        %467 = vmatpush1.msra.mxu0 %v438
        %468 = vmatprep.subr.mxu0 %v441
        %469 = vmatpush1.msra.mxu0 %v440
        %470 = vmatprep.subr.mxu0 %v443
        %471 = vmatpush1.msra.mxu0 %v442
        %472 = vmatprep.subr.mxu0 %v445
        %473 = vmatpush1.msra.mxu0 %v444
        %474 = vmatprep.subr.mxu0 %v464
        %475 = vmatpush1.msra.mxu0 %v461
        %476 = vmatprep.subr.mxu0 0.0
        %477 = vmatpush1.msra.mxu0 0.0
        %478 = vmatprep.subr.mxu0 0.0
        %479 = vmatpush1.msra.mxu0 0.0
        %480 = vmatprep.subr.mxu0 0.0
        %481 = vmatpush1.msra.mxu0 0.0
        %482 = vmatprep.subr.mxu0 0.0
        %483 = vmatpush1.msra.mxu0 0.0
        %484 = vmatprep.subr.mxu0 0.0
        %485 = vmatpush1.msra.mxu0 0.0
        %486 = vmatprep.subr.mxu0 0.0
        %487 = vmatpush1.msra.mxu0 0.0
        %488 = vmatprep.subr.mxu0 0.0
        %489 = vmatpush1.msra.mxu0 0.0
        %490 = vmatprep.subr.mxu0 0.0
        %491 = vmatpush1.msra.mxu0 0.0
        %492 = vmatprep.subr.mxu0 0.0
        %493 = vmatpush1.msra.mxu0 0.0
        %494 = vmatprep.subr.mxu0 0.0
        %495 = vmatpush1.msra.mxu0 0.0
        %496 = vmatprep.subr.mxu0 0.0
        %497 = vmatpush1.msra.mxu0 0.0
        %498 = vmatprep.subr.mxu0 0.0
        %499 = vmatpush1.msra.mxu0 0.0
        %500 = vmatprep.subr.mxu0 0.0
        %501 = vmatpush1.msra.mxu0 0.0
        %502 = vmatprep.subr.mxu0 0.0
        %503 = vmatpush1.msra.mxu0 0.0
        %504 = vmatprep.subr.mxu0 0.0
        %505 = vmatpush1.msra.mxu0 0.0
        %506 = vmatprep.subr.mxu0 0.0
        %507 = vmatpush1.msra.mxu0 0.0
        %508 = vmatprep.subr.mxu0 0.0
        %509 = vmatpush1.msra.mxu0 0.0
        %510 = vmatprep.subr.mxu0 0.0
        %511 = vmatpush1.msra.mxu0 0.0
        %512 = vmatprep.subr.mxu0 0.0
        %513 = vmatpush1.msra.mxu0 0.0
        %514 = vmatprep.subr.mxu0 0.0
        %515 = vmatpush1.msra.mxu0 0.0
        %516 = vmatprep.subr.mxu0 0.0
        %517 = vmatpush1.msra.mxu0 0.0
        %518 = vmatprep.subr.mxu0 0.0
        %519 = vmatpush1.msra.mxu0 0.0
        %520 = vmatprep.subr.mxu0 0.0
        %521 = vmatpush1.msra.mxu0 0.0
        %522 = vmatprep.subr.mxu0 0.0
        %523 = vmatpush1.msra.mxu0 0.0
        %524 = vmatprep.subr.mxu0 0.0
        %525 = vmatpush1.msra.mxu0 0.0
        %526 = vmatprep.subr.mxu0 0.0
        %527 = vmatpush1.msra.mxu0 0.0
        %528 = vmatprep.subr.mxu0 0.0
        %529 = vmatpush1.msra.mxu0 0.0
        %530 = vmatprep.mubr.f32.mxu0 0.0
        %531 = vmatmul.mubr.f32.gmra.mrb[0].mxu0 %v454
        %v532 = vpop.f32.mrb[0].mxu0
        %v533 = vadd.f32 0.0, %v532
        %v534 = vpop.f32.mrb[0].mxu0
        %v535 = vadd.f32 0.0, %v534
        %536 = vmatprep.mubr.f32.mxu0 0.0
        %537 = vmatmul.mubr.f32.gmra.mrb[0].mxu0 %v457
        %v538 = vpop.f32.mrb[0].mxu0
        %v539 = vadd.f32 0.0, %v538
        %v540 = vpop.f32.mrb[0].mxu0
        %v541 = vadd.f32 0.0, %v540
        %542 = vdwg.mxu0
        %v543 = vmax.f32 %v533, 0.0
        %v544 = vmax.f32 %v535, 0.0
        %v545 = vmax.f32 %v539, 0.0
        %v546 = vmax.f32 %v541, 0.0
        %v547 = vld [vmem:[%s2] sm:$0xff]
        %v548 = vld [vmem:[%s2 + $0x8] sm:$0xff]
        %v549 = vld [vmem:[%s2 + $0x10] sm:$0xff]
        %v550 = vld [vmem:[%s2 + $0x18] sm:$0xff]
        %v551 = vld [vmem:[%s2 + $0x20] sm:$0xff]
        %v552 = vld [vmem:[%s2 + $0x28] sm:$0xff]
        %v553 = vld [vmem:[%s2 + $0x30] sm:$0xff]
        %v554 = vld [vmem:[%s2 + $0x38] sm:$0xff]
        %v555 = vld [vmem:[%s2 + $0x40] sm:$0xff]
        %v556 = vld [vmem:[%s2 + $0x48] sm:$0xff]
        %v557 = vld [vmem:[%s2 + $0x50] sm:$0xff]
        %v558 = vld [vmem:[%s2 + $0x58] sm:$0xff]
        %v559 = vld [vmem:[%s2 + $0x60] sm:$0xff]
        %v560 = vld [vmem:[%s2 + $0x68] sm:$0xff]
        %v561 = vld [vmem:[%s2 + $0x70] sm:$0xff]
        %v562 = vld [vmem:[%s2 + $0x78] sm:$0xff]
        %v563 = vld [vmem:[%s3] sm:$0xff]
        %v564 = vld [vmem:[%s3 + $0x8] sm:$0xff]
        %v565 = vld [vmem:[%s3 + $0x10] sm:$0xff]
        %v566 = vld [vmem:[%s3 + $0x18] sm:$0xff]
        %v567 = vld [vmem:[%s3 + $0x20] sm:$0xff]
        %v568 = vld [vmem:[%s3 + $0x28] sm:$0xff]
        %v569 = vld [vmem:[%s3 + $0x30] sm:$0xff]
        %v570 = vld [vmem:[%s3 + $0x38] sm:$0xff]
        %v571 = vld [vmem:[%s3 + $0x40] sm:$0xff]
        %v572 = vld [vmem:[%s3 + $0x48] sm:$0xff]
        %v573 = vld [vmem:[%s3 + $0x50] sm:$0xff]
        %v574 = vld [vmem:[%s3 + $0x58] sm:$0xff]
        %v575 = vld [vmem:[%s3 + $0x60] sm:$0xff]
        %v576 = vld [vmem:[%s3 + $0x68] sm:$0xff]
        %v577 = vld [vmem:[%s3 + $0x70] sm:$0xff]
        %v578 = vld [vmem:[%s3 + $0x78] sm:$0xff]
        %vm579 = vcmask 130048
        %v581 = vsel %vm579, %v563, 0
        %v584 = vsel %vm579, %v564, 0
        %v587 = vsel %vm579, %v565, 0
        %v590 = vsel %vm579, %v566, 0
        %v593 = vsel %vm579, %v567, 0
        %v596 = vsel %vm579, %v568, 0
        %v599 = vsel %vm579, %v569, 0
        %v602 = vsel %vm579, %v570, 0
        %v605 = vsel %vm579, %v571, 0
        %v608 = vsel %vm579, %v572, 0
        %v611 = vsel %vm579, %v573, 0
        %v614 = vsel %vm579, %v574, 0
        %v617 = vsel %vm579, %v575, 0
        %v620 = vsel %vm579, %v576, 0
        %v623 = vsel %vm579, %v577, 0
        %v626 = vsel %vm579, %v578, 0
        %628 = vmatprep.subr.mxu0 %v544
        %629 = vmatpush1.msra.mxu0 %v543
        %630 = vmatprep.subr.mxu0 %v546
        %631 = vmatpush1.msra.mxu0 %v545
        %632 = vmatprep.subr.mxu0 0.0
        %633 = vmatpush1.msra.mxu0 0.0
        %634 = vmatprep.subr.mxu0 0.0
        %635 = vmatpush1.msra.mxu0 0.0
        %636 = vmatprep.subr.mxu0 0.0
        %637 = vmatpush1.msra.mxu0 0.0
        %638 = vmatprep.subr.mxu0 0.0
        %639 = vmatpush1.msra.mxu0 0.0
        %640 = vmatprep.subr.mxu0 0.0
        %641 = vmatpush1.msra.mxu0 0.0
        %642 = vmatprep.subr.mxu0 0.0
        %643 = vmatpush1.msra.mxu0 0.0
        %644 = vmatprep.subr.mxu0 0.0
        %645 = vmatpush1.msra.mxu0 0.0
        %646 = vmatprep.subr.mxu0 0.0
        %647 = vmatpush1.msra.mxu0 0.0
        %648 = vmatprep.subr.mxu0 0.0
        %649 = vmatpush1.msra.mxu0 0.0
        %650 = vmatprep.subr.mxu0 0.0
        %651 = vmatpush1.msra.mxu0 0.0
        %652 = vmatprep.subr.mxu0 0.0
        %653 = vmatpush1.msra.mxu0 0.0
        %654 = vmatprep.subr.mxu0 0.0
        %655 = vmatpush1.msra.mxu0 0.0
        %656 = vmatprep.subr.mxu0 0.0
        %657 = vmatpush1.msra.mxu0 0.0
        %658 = vmatprep.subr.mxu0 0.0
        %659 = vmatpush1.msra.mxu0 0.0
        %660 = vmatprep.subr.mxu0 0.0
        %661 = vmatpush1.msra.mxu0 0.0
        %662 = vmatprep.subr.mxu0 0.0
        %663 = vmatpush1.msra.mxu0 0.0
        %664 = vmatprep.subr.mxu0 0.0
        %665 = vmatpush1.msra.mxu0 0.0
        %666 = vmatprep.subr.mxu0 0.0
        %667 = vmatpush1.msra.mxu0 0.0
        %668 = vmatprep.subr.mxu0 0.0
        %669 = vmatpush1.msra.mxu0 0.0
        %670 = vmatprep.subr.mxu0 0.0
        %671 = vmatpush1.msra.mxu0 0.0
        %672 = vmatprep.subr.mxu0 0.0
        %673 = vmatpush1.msra.mxu0 0.0
        %674 = vmatprep.subr.mxu0 0.0
        %675 = vmatpush1.msra.mxu0 0.0
        %676 = vmatprep.subr.mxu0 0.0
        %677 = vmatpush1.msra.mxu0 0.0
        %678 = vmatprep.subr.mxu0 0.0
        %679 = vmatpush1.msra.mxu0 0.0
        %680 = vmatprep.subr.mxu0 0.0
        %681 = vmatpush1.msra.mxu0 0.0
        %682 = vmatprep.subr.mxu0 0.0
        %683 = vmatpush1.msra.mxu0 0.0
        %684 = vmatprep.subr.mxu0 0.0
        %685 = vmatpush1.msra.mxu0 0.0
        %686 = vmatprep.subr.mxu0 0.0
        %687 = vmatpush1.msra.mxu0 0.0
        %688 = vmatprep.subr.mxu0 0.0
        %689 = vmatpush1.msra.mxu0 0.0
        %690 = vmatprep.subr.mxu0 0.0
        %691 = vmatpush1.msra.mxu0 0.0
        %692 = vmatprep.mubr.f32.mxu0 0.0
        %693 = vmatmul.mubr.f32.gmra.mrb[0].mxu0 %v581
        %v694 = vpop.f32.mrb[0].mxu0
        %v695 = vadd.f32 0.0, %v694
        %v696 = vpop.f32.mrb[0].mxu0
        %v697 = vadd.f32 0.0, %v696
        %698 = vmatprep.mubr.f32.mxu0 0.0
        %699 = vmatmul.mubr.f32.gmra.mrb[0].mxu0 %v584
        %v700 = vpop.f32.mrb[0].mxu0
        %v701 = vadd.f32 0.0, %v700
        %v702 = vpop.f32.mrb[0].mxu0
        %v703 = vadd.f32 0.0, %v702
        %704 = vmatprep.mubr.f32.mxu0 0.0
        %705 = vmatmul.mubr.f32.gmra.mrb[0].mxu0 %v587
        %v706 = vpop.f32.mrb[0].mxu0
        %v707 = vadd.f32 0.0, %v706
        %v708 = vpop.f32.mrb[0].mxu0
        %v709 = vadd.f32 0.0, %v708
        %710 = vmatprep.mubr.f32.mxu0 0.0
        %711 = vmatmul.mubr.f32.gmra.mrb[0].mxu0 %v590
        %v712 = vpop.f32.mrb[0].mxu0
        %v713 = vadd.f32 0.0, %v712
        %v714 = vpop.f32.mrb[0].mxu0
        %v715 = vadd.f32 0.0, %v714
        %716 = vmatprep.mubr.f32.mxu0 0.0
        %717 = vmatmul.mubr.f32.gmra.mrb[0].mxu0 %v593
        %v718 = vpop.f32.mrb[0].mxu0
        %v719 = vadd.f32 0.0, %v718
        %v720 = vpop.f32.mrb[0].mxu0
        %v721 = vadd.f32 0.0, %v720
        %722 = vmatprep.mubr.f32.mxu0 0.0
        %723 = vmatmul.mubr.f32.gmra.mrb[0].mxu0 %v596
        %v724 = vpop.f32.mrb[0].mxu0
        %v725 = vadd.f32 0.0, %v724
        %v726 = vpop.f32.mrb[0].mxu0
        %v727 = vadd.f32 0.0, %v726
        %728 = vmatprep.mubr.f32.mxu0 0.0
        %729 = vmatmul.mubr.f32.gmra.mrb[0].mxu0 %v599
        %v730 = vpop.f32.mrb[0].mxu0
        %v731 = vadd.f32 0.0, %v730
        %v732 = vpop.f32.mrb[0].mxu0
        %v733 = vadd.f32 0.0, %v732
        %734 = vmatprep.mubr.f32.mxu0 0.0
        %735 = vmatmul.mubr.f32.gmra.mrb[0].mxu0 %v602
        %v736 = vpop.f32.mrb[0].mxu0
        %v737 = vadd.f32 0.0, %v736
        %v738 = vpop.f32.mrb[0].mxu0
        %v739 = vadd.f32 0.0, %v738
        %740 = vmatprep.mubr.f32.mxu0 0.0
        %741 = vmatmul.mubr.f32.gmra.mrb[0].mxu0 %v605
        %v742 = vpop.f32.mrb[0].mxu0
        %v743 = vadd.f32 0.0, %v742
        %v744 = vpop.f32.mrb[0].mxu0
        %v745 = vadd.f32 0.0, %v744
        %746 = vmatprep.mubr.f32.mxu0 0.0
        %747 = vmatmul.mubr.f32.gmra.mrb[0].mxu0 %v608
        %v748 = vpop.f32.mrb[0].mxu0
        %v749 = vadd.f32 0.0, %v748
        %v750 = vpop.f32.mrb[0].mxu0
        %v751 = vadd.f32 0.0, %v750
        %752 = vmatprep.mubr.f32.mxu0 0.0
        %753 = vmatmul.mubr.f32.gmra.mrb[0].mxu0 %v611
        %v754 = vpop.f32.mrb[0].mxu0
        %v755 = vadd.f32 0.0, %v754
        %v756 = vpop.f32.mrb[0].mxu0
        %v757 = vadd.f32 0.0, %v756
        %758 = vmatprep.mubr.f32.mxu0 0.0
        %759 = vmatmul.mubr.f32.gmra.mrb[0].mxu0 %v614
        %v760 = vpop.f32.mrb[0].mxu0
        %v761 = vadd.f32 0.0, %v760
        %v762 = vpop.f32.mrb[0].mxu0
        %v763 = vadd.f32 0.0, %v762
        %764 = vmatprep.mubr.f32.mxu0 0.0
        %765 = vmatmul.mubr.f32.gmra.mrb[0].mxu0 %v617
        %v766 = vpop.f32.mrb[0].mxu0
        %v767 = vadd.f32 0.0, %v766
        %v768 = vpop.f32.mrb[0].mxu0
        %v769 = vadd.f32 0.0, %v768
        %770 = vmatprep.mubr.f32.mxu0 0.0
        %771 = vmatmul.mubr.f32.gmra.mrb[0].mxu0 %v620
        %v772 = vpop.f32.mrb[0].mxu0
        %v773 = vadd.f32 0.0, %v772
        %v774 = vpop.f32.mrb[0].mxu0
        %v775 = vadd.f32 0.0, %v774
        %776 = vmatprep.mubr.f32.mxu0 0.0
        %777 = vmatmul.mubr.f32.gmra.mrb[0].mxu0 %v623
        %v778 = vpop.f32.mrb[0].mxu0
        %v779 = vadd.f32 0.0, %v778
        %v780 = vpop.f32.mrb[0].mxu0
        %v781 = vadd.f32 0.0, %v780
        %782 = vmatprep.mubr.f32.mxu0 0.0
        %783 = vmatmul.mubr.f32.gmra.mrb[0].mxu0 %v626
        %v784 = vpop.f32.mrb[0].mxu0
        %v785 = vadd.f32 0.0, %v784
        %v786 = vpop.f32.mrb[0].mxu0
        %v787 = vadd.f32 0.0, %v786
        %788 = vdwg.mxu0
        %vm789 = vcmask 138240
        %v791 = vsel %vm789, %v547, 0
        %v794 = vsel %vm789, %v548, 0
        %v797 = vsel %vm789, %v549, 0
        %v800 = vsel %vm789, %v550, 0
        %v803 = vsel %vm789, %v551, 0
        %v806 = vsel %vm789, %v552, 0
        %v809 = vsel %vm789, %v553, 0
        %v812 = vsel %vm789, %v554, 0
        %v815 = vsel %vm789, %v555, 0
        %v818 = vsel %vm789, %v556, 0
        %v821 = vsel %vm789, %v557, 0
        %v824 = vsel %vm789, %v558, 0
        %v827 = vsel %vm789, %v559, 0
        %v830 = vsel %vm789, %v560, 0
        %v833 = vsel %vm789, %v561, 0
        %v836 = vsel %vm789, %v562, 0
        %v839 = vsel %vm459, %v436, 0
        %v842 = vsel %vm459, %v437, 0
        %844 = vmatprep.subr.mxu0 %v433
        %845 = vmatpush1.msra.mxu0 %v432
        %846 = vmatprep.subr.mxu0 %v435
        %847 = vmatpush1.msra.mxu0 %v434
        %848 = vmatprep.subr.mxu0 %v842
        %849 = vmatpush1.msra.mxu0 %v839
        %850 = vmatprep.subr.mxu0 0.0
        %851 = vmatpush1.msra.mxu0 0.0
        %852 = vmatprep.subr.mxu0 0.0
        %853 = vmatpush1.msra.mxu0 0.0
        %854 = vmatprep.subr.mxu0 0.0
        %855 = vmatpush1.msra.mxu0 0.0
        %856 = vmatprep.subr.mxu0 0.0
        %857 = vmatpush1.msra.mxu0 0.0
        %858 = vmatprep.subr.mxu0 0.0
        %859 = vmatpush1.msra.mxu0 0.0
        %860 = vmatprep.subr.mxu0 0.0
        %861 = vmatpush1.msra.mxu0 0.0
        %862 = vmatprep.subr.mxu0 0.0
        %863 = vmatpush1.msra.mxu0 0.0
        %864 = vmatprep.subr.mxu0 0.0
        %865 = vmatpush1.msra.mxu0 0.0
        %866 = vmatprep.subr.mxu0 0.0
        %867 = vmatpush1.msra.mxu0 0.0
        %868 = vmatprep.subr.mxu0 0.0
        %869 = vmatpush1.msra.mxu0 0.0
        %870 = vmatprep.subr.mxu0 0.0
        %871 = vmatpush1.msra.mxu0 0.0
        %872 = vmatprep.subr.mxu0 0.0
        %873 = vmatpush1.msra.mxu0 0.0
        %874 = vmatprep.subr.mxu0 0.0
        %875 = vmatpush1.msra.mxu0 0.0
        %876 = vmatprep.subr.mxu0 0.0
        %877 = vmatpush1.msra.mxu0 0.0
        %878 = vmatprep.subr.mxu0 0.0
        %879 = vmatpush1.msra.mxu0 0.0
        %880 = vmatprep.subr.mxu0 0.0
        %881 = vmatpush1.msra.mxu0 0.0
        %882 = vmatprep.subr.mxu0 0.0
        %883 = vmatpush1.msra.mxu0 0.0
        %884 = vmatprep.subr.mxu0 0.0
        %885 = vmatpush1.msra.mxu0 0.0
        %886 = vmatprep.subr.mxu0 0.0
        %887 = vmatpush1.msra.mxu0 0.0
        %888 = vmatprep.subr.mxu0 0.0
        %889 = vmatpush1.msra.mxu0 0.0
        %890 = vmatprep.subr.mxu0 0.0
        %891 = vmatpush1.msra.mxu0 0.0
        %892 = vmatprep.subr.mxu0 0.0
        %893 = vmatpush1.msra.mxu0 0.0
        %894 = vmatprep.subr.mxu0 0.0
        %895 = vmatpush1.msra.mxu0 0.0
        %896 = vmatprep.subr.mxu0 0.0
        %897 = vmatpush1.msra.mxu0 0.0
        %898 = vmatprep.subr.mxu0 0.0
        %899 = vmatpush1.msra.mxu0 0.0
        %900 = vmatprep.subr.mxu0 0.0
        %901 = vmatpush1.msra.mxu0 0.0
        %902 = vmatprep.subr.mxu0 0.0
        %903 = vmatpush1.msra.mxu0 0.0
        %904 = vmatprep.subr.mxu0 0.0
        %905 = vmatpush1.msra.mxu0 0.0
        %906 = vmatprep.subr.mxu0 0.0
        %907 = vmatpush1.msra.mxu0 0.0
        %908 = vmatprep.mubr.f32.mxu0 0.0
        %909 = vmatmul.mubr.f32.gmra.mrb[0].mxu0 %v791
        %v910 = vpop.f32.mrb[0].mxu0
        %v911 = vadd.f32 %v695, %v910
        %v912 = vpop.f32.mrb[0].mxu0
        %v913 = vadd.f32 %v697, %v912
        %914 = vmatprep.mubr.f32.mxu0 0.0
        %915 = vmatmul.mubr.f32.gmra.mrb[0].mxu0 %v794
        %v916 = vpop.f32.mrb[0].mxu0
        %v917 = vadd.f32 %v701, %v916
        %v918 = vpop.f32.mrb[0].mxu0
        %v919 = vadd.f32 %v703, %v918
        %920 = vmatprep.mubr.f32.mxu0 0.0
        %921 = vmatmul.mubr.f32.gmra.mrb[0].mxu0 %v797
        %v922 = vpop.f32.mrb[0].mxu0
        %v923 = vadd.f32 %v707, %v922
        %v924 = vpop.f32.mrb[0].mxu0
        %v925 = vadd.f32 %v709, %v924
        %926 = vmatprep.mubr.f32.mxu0 0.0
        %927 = vmatmul.mubr.f32.gmra.mrb[0].mxu0 %v800
        %v928 = vpop.f32.mrb[0].mxu0
        %v929 = vadd.f32 %v713, %v928
        %v930 = vpop.f32.mrb[0].mxu0
        %v931 = vadd.f32 %v715, %v930
        %932 = vmatprep.mubr.f32.mxu0 0.0
        %933 = vmatmul.mubr.f32.gmra.mrb[0].mxu0 %v803
        %v934 = vpop.f32.mrb[0].mxu0
        %v935 = vadd.f32 %v719, %v934
        %v936 = vpop.f32.mrb[0].mxu0
        %v937 = vadd.f32 %v721, %v936
        %938 = vmatprep.mubr.f32.mxu0 0.0
        %939 = vmatmul.mubr.f32.gmra.mrb[0].mxu0 %v806
        %v940 = vpop.f32.mrb[0].mxu0
        %v941 = vadd.f32 %v725, %v940
        %v942 = vpop.f32.mrb[0].mxu0
        %v943 = vadd.f32 %v727, %v942
        %944 = vmatprep.mubr.f32.mxu0 0.0
        %945 = vmatmul.mubr.f32.gmra.mrb[0].mxu0 %v809
        %v946 = vpop.f32.mrb[0].mxu0
        %v947 = vadd.f32 %v731, %v946
        %v948 = vpop.f32.mrb[0].mxu0
        %v949 = vadd.f32 %v733, %v948
        %950 = vmatprep.mubr.f32.mxu0 0.0
        %951 = vmatmul.mubr.f32.gmra.mrb[0].mxu0 %v812
        %v952 = vpop.f32.mrb[0].mxu0
        %v953 = vadd.f32 %v737, %v952
        %v954 = vpop.f32.mrb[0].mxu0
        %v955 = vadd.f32 %v739, %v954
        %956 = vmatprep.mubr.f32.mxu0 0.0
        %957 = vmatmul.mubr.f32.gmra.mrb[0].mxu0 %v815
        %v958 = vpop.f32.mrb[0].mxu0
        %v959 = vadd.f32 %v743, %v958
        %v960 = vpop.f32.mrb[0].mxu0
        %v961 = vadd.f32 %v745, %v960
        %962 = vmatprep.mubr.f32.mxu0 0.0
        %963 = vmatmul.mubr.f32.gmra.mrb[0].mxu0 %v818
        %v964 = vpop.f32.mrb[0].mxu0
        %v965 = vadd.f32 %v749, %v964
        %v966 = vpop.f32.mrb[0].mxu0
        %v967 = vadd.f32 %v751, %v966
        %968 = vmatprep.mubr.f32.mxu0 0.0
        %969 = vmatmul.mubr.f32.gmra.mrb[0].mxu0 %v821
        %v970 = vpop.f32.mrb[0].mxu0
        %v971 = vadd.f32 %v755, %v970
        %v972 = vpop.f32.mrb[0].mxu0
        %v973 = vadd.f32 %v757, %v972
        %974 = vmatprep.mubr.f32.mxu0 0.0
        %975 = vmatmul.mubr.f32.gmra.mrb[0].mxu0 %v824
        %v976 = vpop.f32.mrb[0].mxu0
        %v977 = vadd.f32 %v761, %v976
        %v978 = vpop.f32.mrb[0].mxu0
        %v979 = vadd.f32 %v763, %v978
        %980 = vmatprep.mubr.f32.mxu0 0.0
        %981 = vmatmul.mubr.f32.gmra.mrb[0].mxu0 %v827
        %v982 = vpop.f32.mrb[0].mxu0
        %v983 = vadd.f32 %v767, %v982
        %v984 = vpop.f32.mrb[0].mxu0
        %v985 = vadd.f32 %v769, %v984
        %986 = vmatprep.mubr.f32.mxu0 0.0
        %987 = vmatmul.mubr.f32.gmra.mrb[0].mxu0 %v830
        %v988 = vpop.f32.mrb[0].mxu0
        %v989 = vadd.f32 %v773, %v988
        %v990 = vpop.f32.mrb[0].mxu0
        %v991 = vadd.f32 %v775, %v990
        %992 = vmatprep.mubr.f32.mxu0 0.0
        %993 = vmatmul.mubr.f32.gmra.mrb[0].mxu0 %v833
        %v994 = vpop.f32.mrb[0].mxu0
        %v995 = vadd.f32 %v779, %v994
        %v996 = vpop.f32.mrb[0].mxu0
        %v997 = vadd.f32 %v781, %v996
        %998 = vmatprep.mubr.f32.mxu0 0.0
        %999 = vmatmul.mubr.f32.gmra.mrb[0].mxu0 %v836
        %v1000 = vpop.f32.mrb[0].mxu0
        %v1001 = vadd.f32 %v785, %v1000
        %v1002 = vpop.f32.mrb[0].mxu0
        %v1003 = vadd.f32 %v787, %v1002
        %1004 = vdwg.mxu0
        %v1005 = vmax.f32 %v911, 0.0
        %v1006 = vmax.f32 %v913, 0.0
        %v1007 = vmax.f32 %v917, 0.0
        %v1008 = vmax.f32 %v919, 0.0
        %v1009 = vmax.f32 %v923, 0.0
        %v1010 = vmax.f32 %v925, 0.0
        %v1011 = vmax.f32 %v929, 0.0
        %v1012 = vmax.f32 %v931, 0.0
        %v1013 = vmax.f32 %v935, 0.0
        %v1014 = vmax.f32 %v937, 0.0
        %v1015 = vmax.f32 %v941, 0.0
        %v1016 = vmax.f32 %v943, 0.0
        %v1017 = vmax.f32 %v947, 0.0
        %v1018 = vmax.f32 %v949, 0.0
        %v1019 = vmax.f32 %v953, 0.0
        %v1020 = vmax.f32 %v955, 0.0
        %v1021 = vmax.f32 %v959, 0.0
        %v1022 = vmax.f32 %v961, 0.0
        %v1023 = vmax.f32 %v965, 0.0
        %v1024 = vmax.f32 %v967, 0.0
        %v1025 = vmax.f32 %v971, 0.0
        %v1026 = vmax.f32 %v973, 0.0
        %v1027 = vmax.f32 %v977, 0.0
        %v1028 = vmax.f32 %v979, 0.0
        %v1029 = vmax.f32 %v983, 0.0
        %v1030 = vmax.f32 %v985, 0.0
        %v1031 = vmax.f32 %v989, 0.0
        %v1032 = vmax.f32 %v991, 0.0
        %v1033 = vmax.f32 %v995, 0.0
        %v1034 = vmax.f32 %v997, 0.0
        %v1035 = vmax.f32 %v1001, 0.0
        %v1036 = vmax.f32 %v1003, 0.0
        %v1037 = vld [vmem:[%s4] sm:$0xff]
        %v1038 = vld [vmem:[%s4 + $0x8] sm:$0xff]
        %v1039 = vld [vmem:[%s4 + $0x10] sm:$0xff]
        %v1040 = vld [vmem:[%s4 + $0x18] sm:$0xff]
        %v1041 = vld [vmem:[%s4 + $0x20] sm:$0xff]
        %v1042 = vld [vmem:[%s4 + $0x28] sm:$0xff]
        %v1043 = vld [vmem:[%s4 + $0x30] sm:$0xff]
        %v1044 = vld [vmem:[%s4 + $0x38] sm:$0xff]
        %v1045 = vld [vmem:[%s4 + $0x40] sm:$0xff]
        %v1046 = vld [vmem:[%s4 + $0x48] sm:$0xff]
        %v1047 = vld [vmem:[%s4 + $0x50] sm:$0xff]
        %v1048 = vld [vmem:[%s4 + $0x58] sm:$0xff]
        %v1049 = vld [vmem:[%s4 + $0x60] sm:$0xff]
        %v1050 = vld [vmem:[%s4 + $0x68] sm:$0xff]
        %v1051 = vld [vmem:[%s4 + $0x70] sm:$0xff]
        %v1052 = vld [vmem:[%s4 + $0x78] sm:$0xff]
        %v1053 = vld [vmem:[%s5] sm:$0xff]
        %v1054 = vld [vmem:[%s5 + $0x8] sm:$0xff]
        %v1055 = vld [vmem:[%s5 + $0x10] sm:$0xff]
        %v1056 = vld [vmem:[%s5 + $0x18] sm:$0xff]
        %v1057 = vld [vmem:[%s5 + $0x20] sm:$0xff]
        %v1058 = vld [vmem:[%s5 + $0x28] sm:$0xff]
        %v1059 = vld [vmem:[%s5 + $0x30] sm:$0xff]
        %v1060 = vld [vmem:[%s5 + $0x38] sm:$0xff]
        %v1061 = vld [vmem:[%s5 + $0x40] sm:$0xff]
        %v1062 = vld [vmem:[%s5 + $0x48] sm:$0xff]
        %v1063 = vld [vmem:[%s5 + $0x50] sm:$0xff]
        %v1064 = vld [vmem:[%s5 + $0x58] sm:$0xff]
        %v1065 = vld [vmem:[%s5 + $0x60] sm:$0xff]
        %v1066 = vld [vmem:[%s5 + $0x68] sm:$0xff]
        %v1067 = vld [vmem:[%s5 + $0x70] sm:$0xff]
        %v1068 = vld [vmem:[%s5 + $0x78] sm:$0xff]
        %1070 = vset.pattern.permute.xlu0 0
        %1071 = vperm.xlu0 %1070, %v1053
        %v1072 = vpop.permute.xlu0 %1071
        %1075 = vset.pattern.permute.xlu0 0
        %1076 = vperm.xlu0 %1075, %v1054
        %v1077 = vpop.permute.xlu0 %1076
        %1080 = vset.pattern.permute.xlu0 0
        %1081 = vperm.xlu0 %1080, %v1055
        %v1082 = vpop.permute.xlu0 %1081
        %1085 = vset.pattern.permute.xlu0 0
        %1086 = vperm.xlu0 %1085, %v1056
        %v1087 = vpop.permute.xlu0 %1086
        %1090 = vset.pattern.permute.xlu0 0
        %1091 = vperm.xlu0 %1090, %v1057
        %v1092 = vpop.permute.xlu0 %1091
        %1095 = vset.pattern.permute.xlu0 0
        %1096 = vperm.xlu0 %1095, %v1058
        %v1097 = vpop.permute.xlu0 %1096
        %1100 = vset.pattern.permute.xlu0 0
        %1101 = vperm.xlu0 %1100, %v1059
        %v1102 = vpop.permute.xlu0 %1101
        %1105 = vset.pattern.permute.xlu0 0
        %1106 = vperm.xlu0 %1105, %v1060
        %v1107 = vpop.permute.xlu0 %1106
        %1110 = vset.pattern.permute.xlu0 0
        %1111 = vperm.xlu0 %1110, %v1061
        %v1112 = vpop.permute.xlu0 %1111
        %1115 = vset.pattern.permute.xlu0 0
        %1116 = vperm.xlu0 %1115, %v1062
        %v1117 = vpop.permute.xlu0 %1116
        %1120 = vset.pattern.permute.xlu0 0
        %1121 = vperm.xlu0 %1120, %v1063
        %v1122 = vpop.permute.xlu0 %1121
        %1125 = vset.pattern.permute.xlu0 0
        %1126 = vperm.xlu0 %1125, %v1064
        %v1127 = vpop.permute.xlu0 %1126
        %1130 = vset.pattern.permute.xlu0 0
        %1131 = vperm.xlu0 %1130, %v1065
        %v1132 = vpop.permute.xlu0 %1131
        %1135 = vset.pattern.permute.xlu0 0
        %1136 = vperm.xlu0 %1135, %v1066
        %v1137 = vpop.permute.xlu0 %1136
        %1140 = vset.pattern.permute.xlu0 0
        %1141 = vperm.xlu0 %1140, %v1067
        %v1142 = vpop.permute.xlu0 %1141
        %1145 = vset.pattern.permute.xlu0 0
        %1146 = vperm.xlu0 %1145, %v1068
        %v1147 = vpop.permute.xlu0 %1146
        %1149 = vmatprep.subr.mxu0 %v1006
        %1150 = vmatpush1.msra.mxu0 %v1005
        %1151 = vmatprep.subr.mxu0 %v1008
        %1152 = vmatpush1.msra.mxu0 %v1007
        %1153 = vmatprep.subr.mxu0 %v1010
        %1154 = vmatpush1.msra.mxu0 %v1009
        %1155 = vmatprep.subr.mxu0 %v1012
        %1156 = vmatpush1.msra.mxu0 %v1011
        %1157 = vmatprep.subr.mxu0 %v1014
        %1158 = vmatpush1.msra.mxu0 %v1013
        %1159 = vmatprep.subr.mxu0 %v1016
        %1160 = vmatpush1.msra.mxu0 %v1015
        %1161 = vmatprep.subr.mxu0 %v1018
        %1162 = vmatpush1.msra.mxu0 %v1017
        %1163 = vmatprep.subr.mxu0 %v1020
        %1164 = vmatpush1.msra.mxu0 %v1019
        %1165 = vmatprep.subr.mxu0 %v1022
        %1166 = vmatpush1.msra.mxu0 %v1021
        %1167 = vmatprep.subr.mxu0 %v1024
        %1168 = vmatpush1.msra.mxu0 %v1023
        %1169 = vmatprep.subr.mxu0 %v1026
        %1170 = vmatpush1.msra.mxu0 %v1025
        %1171 = vmatprep.subr.mxu0 %v1028
        %1172 = vmatpush1.msra.mxu0 %v1027
        %1173 = vmatprep.subr.mxu0 %v1030
        %1174 = vmatpush1.msra.mxu0 %v1029
        %1175 = vmatprep.subr.mxu0 %v1032
        %1176 = vmatpush1.msra.mxu0 %v1031
        %1177 = vmatprep.subr.mxu0 %v1034
        %1178 = vmatpush1.msra.mxu0 %v1033
        %1179 = vmatprep.subr.mxu0 %v1036
        %1180 = vmatpush1.msra.mxu0 %v1035
        %1181 = vmatprep.subr.mxu0 0.0
        %1182 = vmatpush1.msra.mxu0 0.0
        %1183 = vmatprep.subr.mxu0 0.0
        %1184 = vmatpush1.msra.mxu0 0.0
        %1185 = vmatprep.subr.mxu0 0.0
        %1186 = vmatpush1.msra.mxu0 0.0
        %1187 = vmatprep.subr.mxu0 0.0
        %1188 = vmatpush1.msra.mxu0 0.0
        %1189 = vmatprep.subr.mxu0 0.0
        %1190 = vmatpush1.msra.mxu0 0.0
        %1191 = vmatprep.subr.mxu0 0.0
        %1192 = vmatpush1.msra.mxu0 0.0
        %1193 = vmatprep.subr.mxu0 0.0
        %1194 = vmatpush1.msra.mxu0 0.0
        %1195 = vmatprep.subr.mxu0 0.0
        %1196 = vmatpush1.msra.mxu0 0.0
        %1197 = vmatprep.subr.mxu0 0.0
        %1198 = vmatpush1.msra.mxu0 0.0
        %1199 = vmatprep.subr.mxu0 0.0
        %1200 = vmatpush1.msra.mxu0 0.0
        %1201 = vmatprep.subr.mxu0 0.0
        %1202 = vmatpush1.msra.mxu0 0.0
        %1203 = vmatprep.subr.mxu0 0.0
        %1204 = vmatpush1.msra.mxu0 0.0
        %1205 = vmatprep.subr.mxu0 0.0
        %1206 = vmatpush1.msra.mxu0 0.0
        %1207 = vmatprep.subr.mxu0 0.0
        %1208 = vmatpush1.msra.mxu0 0.0
        %1209 = vmatprep.subr.mxu0 0.0
        %1210 = vmatpush1.msra.mxu0 0.0
        %1211 = vmatprep.subr.mxu0 0.0
        %1212 = vmatpush1.msra.mxu0 0.0
        %1213 = vmatprep.mubr.f32.mxu0 0.0
        %1214 = vmatmul.mubr.f32.gmra.mrb[0].mxu0 %v1037
        %v1215 = vpop.f32.mrb[0].mxu0
        %v1216 = vadd.f32 %v1072, %v1215
        %v1217 = vpop.f32.mrb[0].mxu0
        %v1218 = vadd.f32 %v1072, %v1217
        %1219 = vmatprep.mubr.f32.mxu0 0.0
        %1220 = vmatmul.mubr.f32.gmra.mrb[0].mxu0 %v1038
        %v1221 = vpop.f32.mrb[0].mxu0
        %v1222 = vadd.f32 %v1077, %v1221
        %v1223 = vpop.f32.mrb[0].mxu0
        %v1224 = vadd.f32 %v1077, %v1223
        %1225 = vmatprep.mubr.f32.mxu0 0.0
        %1226 = vmatmul.mubr.f32.gmra.mrb[0].mxu0 %v1039
        %v1227 = vpop.f32.mrb[0].mxu0
        %v1228 = vadd.f32 %v1082, %v1227
        %v1229 = vpop.f32.mrb[0].mxu0
        %v1230 = vadd.f32 %v1082, %v1229
        %1231 = vmatprep.mubr.f32.mxu0 0.0
        %1232 = vmatmul.mubr.f32.gmra.mrb[0].mxu0 %v1040
        %v1233 = vpop.f32.mrb[0].mxu0
        %v1234 = vadd.f32 %v1087, %v1233
        %v1235 = vpop.f32.mrb[0].mxu0
        %v1236 = vadd.f32 %v1087, %v1235
        %1237 = vmatprep.mubr.f32.mxu0 0.0
        %1238 = vmatmul.mubr.f32.gmra.mrb[0].mxu0 %v1041
        %v1239 = vpop.f32.mrb[0].mxu0
        %v1240 = vadd.f32 %v1092, %v1239
        %v1241 = vpop.f32.mrb[0].mxu0
        %v1242 = vadd.f32 %v1092, %v1241
        %1243 = vmatprep.mubr.f32.mxu0 0.0
        %1244 = vmatmul.mubr.f32.gmra.mrb[0].mxu0 %v1042
        %v1245 = vpop.f32.mrb[0].mxu0
        %v1246 = vadd.f32 %v1097, %v1245
        %v1247 = vpop.f32.mrb[0].mxu0
        %v1248 = vadd.f32 %v1097, %v1247
        %1249 = vmatprep.mubr.f32.mxu0 0.0
        %1250 = vmatmul.mubr.f32.gmra.mrb[0].mxu0 %v1043
        %v1251 = vpop.f32.mrb[0].mxu0
        %v1252 = vadd.f32 %v1102, %v1251
        %v1253 = vpop.f32.mrb[0].mxu0
        %v1254 = vadd.f32 %v1102, %v1253
        %1255 = vmatprep.mubr.f32.mxu0 0.0
        %1256 = vmatmul.mubr.f32.gmra.mrb[0].mxu0 %v1044
        %v1257 = vpop.f32.mrb[0].mxu0
        %v1258 = vadd.f32 %v1107, %v1257
        %v1259 = vpop.f32.mrb[0].mxu0
        %v1260 = vadd.f32 %v1107, %v1259
        %1261 = vmatprep.mubr.f32.mxu0 0.0
        %1262 = vmatmul.mubr.f32.gmra.mrb[0].mxu0 %v1045
        %v1263 = vpop.f32.mrb[0].mxu0
        %v1264 = vadd.f32 %v1112, %v1263
        %v1265 = vpop.f32.mrb[0].mxu0
        %v1266 = vadd.f32 %v1112, %v1265
        %1267 = vmatprep.mubr.f32.mxu0 0.0
        %1268 = vmatmul.mubr.f32.gmra.mrb[0].mxu0 %v1046
        %v1269 = vpop.f32.mrb[0].mxu0
        %v1270 = vadd.f32 %v1117, %v1269
        %v1271 = vpop.f32.mrb[0].mxu0
        %v1272 = vadd.f32 %v1117, %v1271
        %1273 = vmatprep.mubr.f32.mxu0 0.0
        %1274 = vmatmul.mubr.f32.gmra.mrb[0].mxu0 %v1047
        %v1275 = vpop.f32.mrb[0].mxu0
        %v1276 = vadd.f32 %v1122, %v1275
        %v1277 = vpop.f32.mrb[0].mxu0
        %v1278 = vadd.f32 %v1122, %v1277
        %1279 = vmatprep.mubr.f32.mxu0 0.0
        %1280 = vmatmul.mubr.f32.gmra.mrb[0].mxu0 %v1048
        %v1281 = vpop.f32.mrb[0].mxu0
        %v1282 = vadd.f32 %v1127, %v1281
        %v1283 = vpop.f32.mrb[0].mxu0
        %v1284 = vadd.f32 %v1127, %v1283
        %1285 = vmatprep.mubr.f32.mxu0 0.0
        %1286 = vmatmul.mubr.f32.gmra.mrb[0].mxu0 %v1049
        %v1287 = vpop.f32.mrb[0].mxu0
        %v1288 = vadd.f32 %v1132, %v1287
        %v1289 = vpop.f32.mrb[0].mxu0
        %v1290 = vadd.f32 %v1132, %v1289
        %1291 = vmatprep.mubr.f32.mxu0 0.0
        %1292 = vmatmul.mubr.f32.gmra.mrb[0].mxu0 %v1050
        %v1293 = vpop.f32.mrb[0].mxu0
        %v1294 = vadd.f32 %v1137, %v1293
        %v1295 = vpop.f32.mrb[0].mxu0
        %v1296 = vadd.f32 %v1137, %v1295
        %1297 = vmatprep.mubr.f32.mxu0 0.0
        %1298 = vmatmul.mubr.f32.gmra.mrb[0].mxu0 %v1051
        %v1299 = vpop.f32.mrb[0].mxu0
        %v1300 = vadd.f32 %v1142, %v1299
        %v1301 = vpop.f32.mrb[0].mxu0
        %v1302 = vadd.f32 %v1142, %v1301
        %1303 = vmatprep.mubr.f32.mxu0 0.0
        %1304 = vmatmul.mubr.f32.gmra.mrb[0].mxu0 %v1052
        %v1305 = vpop.f32.mrb[0].mxu0
        %v1306 = vadd.f32 %v1147, %v1305
        %v1307 = vpop.f32.mrb[0].mxu0
        %v1308 = vadd.f32 %v1147, %v1307
        %1309 = vdwg.mxu0
        %v1310 = vmax.f32 %v1216, 0.0
        %v1311 = vmax.f32 %v1218, 0.0
        %v1312 = vmax.f32 %v1222, 0.0
        %v1313 = vmax.f32 %v1224, 0.0
        %v1314 = vmax.f32 %v1228, 0.0
        %v1315 = vmax.f32 %v1230, 0.0
        %v1316 = vmax.f32 %v1234, 0.0
        %v1317 = vmax.f32 %v1236, 0.0
        %v1318 = vmax.f32 %v1240, 0.0
        %v1319 = vmax.f32 %v1242, 0.0
        %v1320 = vmax.f32 %v1246, 0.0
        %v1321 = vmax.f32 %v1248, 0.0
        %v1322 = vmax.f32 %v1252, 0.0
        %v1323 = vmax.f32 %v1254, 0.0
        %v1324 = vmax.f32 %v1258, 0.0
        %v1325 = vmax.f32 %v1260, 0.0
        %v1326 = vmax.f32 %v1264, 0.0
        %v1327 = vmax.f32 %v1266, 0.0
        %v1328 = vmax.f32 %v1270, 0.0
        %v1329 = vmax.f32 %v1272, 0.0
        %v1330 = vmax.f32 %v1276, 0.0
        %v1331 = vmax.f32 %v1278, 0.0
        %v1332 = vmax.f32 %v1282, 0.0
        %v1333 = vmax.f32 %v1284, 0.0
        %v1334 = vmax.f32 %v1288, 0.0
        %v1335 = vmax.f32 %v1290, 0.0
        %v1336 = vmax.f32 %v1294, 0.0
        %v1337 = vmax.f32 %v1296, 0.0
        %v1338 = vmax.f32 %v1300, 0.0
        %v1339 = vmax.f32 %v1302, 0.0
        %v1340 = vmax.f32 %v1306, 0.0
        %v1341 = vmax.f32 %v1308, 0.0
        %v1342 = vld [vmem:[%s6] sm:$0x3]
        %v1343 = vld [vmem:[%s7] sm:$0x3]
        %1345 = vset.pattern.permute.xlu0 0
        %1346 = vperm.xlu0 %1345, %v1343
        %v1347 = vpop.permute.xlu0 %1346
        %1349 = vmatprep.subr.mxu0 %v1311
        %1350 = vmatpush1.msra.mxu0 %v1310
        %1351 = vmatprep.subr.mxu0 %v1313
        %1352 = vmatpush1.msra.mxu0 %v1312
        %1353 = vmatprep.subr.mxu0 %v1315
        %1354 = vmatpush1.msra.mxu0 %v1314
        %1355 = vmatprep.subr.mxu0 %v1317
        %1356 = vmatpush1.msra.mxu0 %v1316
        %1357 = vmatprep.subr.mxu0 %v1319
        %1358 = vmatpush1.msra.mxu0 %v1318
        %1359 = vmatprep.subr.mxu0 %v1321
        %1360 = vmatpush1.msra.mxu0 %v1320
        %1361 = vmatprep.subr.mxu0 %v1323
        %1362 = vmatpush1.msra.mxu0 %v1322
        %1363 = vmatprep.subr.mxu0 %v1325
        %1364 = vmatpush1.msra.mxu0 %v1324
        %1365 = vmatprep.subr.mxu0 %v1327
        %1366 = vmatpush1.msra.mxu0 %v1326
        %1367 = vmatprep.subr.mxu0 %v1329
        %1368 = vmatpush1.msra.mxu0 %v1328
        %1369 = vmatprep.subr.mxu0 %v1331
        %1370 = vmatpush1.msra.mxu0 %v1330
        %1371 = vmatprep.subr.mxu0 %v1333
        %1372 = vmatpush1.msra.mxu0 %v1332
        %1373 = vmatprep.subr.mxu0 %v1335
        %1374 = vmatpush1.msra.mxu0 %v1334
        %1375 = vmatprep.subr.mxu0 %v1337
        %1376 = vmatpush1.msra.mxu0 %v1336
        %1377 = vmatprep.subr.mxu0 %v1339
        %1378 = vmatpush1.msra.mxu0 %v1338
        %1379 = vmatprep.subr.mxu0 %v1341
        %1380 = vmatpush1.msra.mxu0 %v1340
        %1381 = vmatprep.subr.mxu0 0.0
        %1382 = vmatpush1.msra.mxu0 0.0
        %1383 = vmatprep.subr.mxu0 0.0
        %1384 = vmatpush1.msra.mxu0 0.0
        %1385 = vmatprep.subr.mxu0 0.0
        %1386 = vmatpush1.msra.mxu0 0.0
        %1387 = vmatprep.subr.mxu0 0.0
        %1388 = vmatpush1.msra.mxu0 0.0
        %1389 = vmatprep.subr.mxu0 0.0
        %1390 = vmatpush1.msra.mxu0 0.0
        %1391 = vmatprep.subr.mxu0 0.0
        %1392 = vmatpush1.msra.mxu0 0.0
        %1393 = vmatprep.subr.mxu0 0.0
        %1394 = vmatpush1.msra.mxu0 0.0
        %1395 = vmatprep.subr.mxu0 0.0
        %1396 = vmatpush1.msra.mxu0 0.0
        %1397 = vmatprep.subr.mxu0 0.0
        %1398 = vmatpush1.msra.mxu0 0.0
        %1399 = vmatprep.subr.mxu0 0.0
        %1400 = vmatpush1.msra.mxu0 0.0
        %1401 = vmatprep.subr.mxu0 0.0
        %1402 = vmatpush1.msra.mxu0 0.0
        %1403 = vmatprep.subr.mxu0 0.0
        %1404 = vmatpush1.msra.mxu0 0.0
        %1405 = vmatprep.subr.mxu0 0.0
        %1406 = vmatpush1.msra.mxu0 0.0
        %1407 = vmatprep.subr.mxu0 0.0
        %1408 = vmatpush1.msra.mxu0 0.0
        %1409 = vmatprep.subr.mxu0 0.0
        %1410 = vmatpush1.msra.mxu0 0.0
        %1411 = vmatprep.subr.mxu0 0.0
        %1412 = vmatpush1.msra.mxu0 0.0
        %1413 = vmatprep.mubr.f32.mxu0 0.0
        %1414 = vmatmul.mubr.f32.gmra.mrb[0].mxu0 %v1342
        %v1415 = vpop.f32.mrb[0].mxu0
        %v1416 = vadd.f32 %v1347, %v1415
        %v1417 = vpop.f32.mrb[0].mxu0
        %v1418 = vadd.f32 %v1347, %v1417
        %1419 = vdwg.mxu0
        %v1420 = vmul.f32 %v1416, 0.5
        %v1421 = vmul.f32 %v1418, 0.5
        %v1422 = vtanh.pop %v1420
        %v1423 = vtanh.pop %v1421
        %v1424 = vmul.f32 %v1422, 0.5
        %v1425 = vmul.f32 %v1423, 0.5
        %v1426 = vadd.f32 %v1424, 0.5
        %v1427 = vadd.f32 %v1425, 0.5
        %v1428 = vsub.f32 0.0, %v1426
        %v1429 = vsub.f32 0.0, %v1427
        %v1430 = vlog2.pop %v448
        %v1431 = vmul.f32 %v1430, 0.6931472
        %v1432 = vlog2.pop %v449
        %v1433 = vmul.f32 %v1432, 0.6931472
        %v1434 = vlaneseq
        %v1435 = vshrl.u32 %v1434, 7
        %v1436 = vsub.s32 1, %v1435
        %v1437 = vrot.slane %v1428, %v1436
        %v1438 = vlaneseq
        %v1439 = vshrl.u32 %v1438, 7
        %v1440 = vsub.s32 1, %v1439
        %v1441 = vrot.slane %v1429, %v1440
        %v1442 = vmul.f32 %v1437, %v1431
        %v1443 = vmul.f32 %v1441, %v1433
        %v1444 = vmul.f32 %v1442, 1.442695
        %v1445 = vpow.pop %v1444
        %v1446 = vmul.f32 %v1443, 1.442695
        %v1447 = vpow.pop %v1446
        %v1450 = vrot.slane %v1445, 1
        %v1451 = vrot.slane %v1447, 1
        %v1454 = vadd.f32 %v1445, %v1450
        %v1455 = vadd.f32 %v1447, %v1451
        %v1456 = vrcp.pop %v1454
        %v1457 = vrcp.pop %v1455
        %v1460 = vrot.slane %v1456, 1
        %v1461 = vrot.slane %v1457, 1
        %v1464 = vmul.f32 %v1426, %v1460
        %v1465 = vmul.f32 %v1427, %v1461
        %v1466 = vmul.f32 %v1464, 0.01
        %v1467 = vmul.f32 %v1465, 0.01
        %v1470 = vcombine.low %v1426, %v1427
        %v1472 = vunpack.c.l.s4 1966171168
        %v1473 = vunpack.c.0.s8 %v1472
        %v1474 = vlaneseq
        %v1475 = vshrl.u32 %v1474, 7
        %v1476 = vsub.s32 %v1473, %v1475
        %v1477 = vrot.slane %v1470, %v1476
        %v1479 = vunpack.c.l.s4 1966171168
        %v1480 = vunpack.c.0.s8 %v1479
        %v1481 = vlaneseq
        %v1482 = vshrl.u32 %v1481, 7
        %v1483 = vsub.s32 %v1480, %v1482
        %v1484 = vrot.slane %v1477, %v1483
        %v1486 = vlaneseq
        %vm1487 = vcmp.ge.s32.totalorder %v1486, 0
        %vm1488 = vcmp.lt.s32.totalorder %v1486, 256
        %vm1489 = vmand %vm1487, %vm1488
        %1490 = vst.msk [vmem:[#allocation2] ss:$8 sm:$0x3] %vm1489, %v1484
        %1491 = vst.msk [vmem:[#allocation2] ss:$8 sm:$0x0] %vm1489, %v1484
        %v1492 = vcombine.low %v1456, %v1457
        %v1494 = vunpack.c.l.s4 1966171168
        %v1495 = vunpack.c.0.s8 %v1494
        %v1496 = vlaneseq
        %v1497 = vshrl.u32 %v1496, 7
        %v1498 = vsub.s32 %v1495, %v1497
        %v1499 = vrot.slane %v1492, %v1498
        %v1500 = vcombine.high %v1499, %v1499
        %v1502 = vunpack.c.l.s4 1966171168
        %v1503 = vunpack.c.0.s8 %v1502
        %v1504 = vlaneseq
        %v1505 = vshrl.u32 %v1504, 7
        %v1506 = vsub.s32 %v1503, %v1505
        %v1507 = vrot.slane %v1500, %v1506
        %s1509 = scalar_lea.vmem [#allocation2], 1
        %1510 = vst.msk [vmem:[%s1509] ss:$8 sm:$0x3] %vm1489, %v1507
        %1511 = vst.msk [vmem:[%s1509] ss:$8 sm:$0x0] %vm1489, %v1507
        %v1514 = vcombine.low %v1466, %v1467
        %v1516 = vunpack.c.l.s4 1966171168
        %v1517 = vunpack.c.0.s8 %v1516
        %v1518 = vlaneseq
        %v1519 = vshrl.u32 %v1518, 7
        %v1520 = vsub.s32 %v1517, %v1519
        %v1521 = vrot.slane %v1514, %v1520
        %v1523 = vunpack.c.l.s4 1966171168
        %v1524 = vunpack.c.0.s8 %v1523
        %v1525 = vlaneseq
        %v1526 = vshrl.u32 %v1525, 7
        %v1527 = vsub.s32 %v1524, %v1526
        %v1528 = vrot.slane %v1521, %v1527
        %s1530 = scalar_lea.vmem [#allocation2], 2
        %1531 = vst.msk [vmem:[%s1530] ss:$8 sm:$0x3] %vm1489, %v1528
        %1532 = vst.msk [vmem:[%s1530] ss:$8 sm:$0x0] %vm1489, %v1528
        %s1533 = scalar_lea.vmem [#allocation2], 3
        %1534 = vst.msk [vmem:[%s1533] ss:$8 sm:$0x3] %vm1489, 1.0
        %1535 = vst.msk [vmem:[%s1533] ss:$8 sm:$0x0] %vm1489, 1.0
        %1536 = vst [vmem:[#allocation2] sm:$0xf0] 0.0
        %1537 = vst [vmem:[#allocation2 + $0x8] sm:$0xf0] 0.0
        %v1538 = vld [vmem:[%s8] sm:$0xff]
        %v1539 = vld [vmem:[%s8 + $0x8] sm:$0x3]
        %v1540 = vld [vmem:[#allocation2] sm:$0xff]
        %v1541 = vld [vmem:[#allocation2 + $0x8] sm:$0xff]
        %vm1542 = vcmask 64512
        %v1544 = vsel %vm1542, %v1538, 0
        %v1547 = vsel %vm1542, %v1539, 0
        %1549 = vmatprep.subr.mxu0 %v1541
        %1550 = vmatpush1.msra.mxu0 %v1540
        %1551 = vmatprep.subr.mxu0 0.0
        %1552 = vmatpush1.msra.mxu0 0.0
        %1553 = vmatprep.subr.mxu0 0.0
        %1554 = vmatpush1.msra.mxu0 0.0
        %1555 = vmatprep.subr.mxu0 0.0
        %1556 = vmatpush1.msra.mxu0 0.0
        %1557 = vmatprep.subr.mxu0 0.0
        %1558 = vmatpush1.msra.mxu0 0.0
        %1559 = vmatprep.subr.mxu0 0.0
        %1560 = vmatpush1.msra.mxu0 0.0
        %1561 = vmatprep.subr.mxu0 0.0
        %1562 = vmatpush1.msra.mxu0 0.0
        %1563 = vmatprep.subr.mxu0 0.0
        %1564 = vmatpush1.msra.mxu0 0.0
        %1565 = vmatprep.subr.mxu0 0.0
        %1566 = vmatpush1.msra.mxu0 0.0
        %1567 = vmatprep.subr.mxu0 0.0
        %1568 = vmatpush1.msra.mxu0 0.0
        %1569 = vmatprep.subr.mxu0 0.0
        %1570 = vmatpush1.msra.mxu0 0.0
        %1571 = vmatprep.subr.mxu0 0.0
        %1572 = vmatpush1.msra.mxu0 0.0
        %1573 = vmatprep.subr.mxu0 0.0
        %1574 = vmatpush1.msra.mxu0 0.0
        %1575 = vmatprep.subr.mxu0 0.0
        %1576 = vmatpush1.msra.mxu0 0.0
        %1577 = vmatprep.subr.mxu0 0.0
        %1578 = vmatpush1.msra.mxu0 0.0
        %1579 = vmatprep.subr.mxu0 0.0
        %1580 = vmatpush1.msra.mxu0 0.0
        %1581 = vmatprep.subr.mxu0 0.0
        %1582 = vmatpush1.msra.mxu0 0.0
        %1583 = vmatprep.subr.mxu0 0.0
        %1584 = vmatpush1.msra.mxu0 0.0
        %1585 = vmatprep.subr.mxu0 0.0
        %1586 = vmatpush1.msra.mxu0 0.0
        %1587 = vmatprep.subr.mxu0 0.0
        %1588 = vmatpush1.msra.mxu0 0.0
        %1589 = vmatprep.subr.mxu0 0.0
        %1590 = vmatpush1.msra.mxu0 0.0
        %1591 = vmatprep.subr.mxu0 0.0
        %1592 = vmatpush1.msra.mxu0 0.0
        %1593 = vmatprep.subr.mxu0 0.0
        %1594 = vmatpush1.msra.mxu0 0.0
        %1595 = vmatprep.subr.mxu0 0.0
        %1596 = vmatpush1.msra.mxu0 0.0
        %1597 = vmatprep.subr.mxu0 0.0
        %1598 = vmatpush1.msra.mxu0 0.0
        %1599 = vmatprep.subr.mxu0 0.0
        %1600 = vmatpush1.msra.mxu0 0.0
        %1601 = vmatprep.subr.mxu0 0.0
        %1602 = vmatpush1.msra.mxu0 0.0
        %1603 = vmatprep.subr.mxu0 0.0
        %1604 = vmatpush1.msra.mxu0 0.0
        %1605 = vmatprep.subr.mxu0 0.0
        %1606 = vmatpush1.msra.mxu0 0.0
        %1607 = vmatprep.subr.mxu0 0.0
        %1608 = vmatpush1.msra.mxu0 0.0
        %1609 = vmatprep.subr.mxu0 0.0
        %1610 = vmatpush1.msra.mxu0 0.0
        %1611 = vmatprep.subr.mxu0 0.0
        %1612 = vmatpush1.msra.mxu0 0.0
        %1613 = vmatprep.mubr.f32.mxu0 0.0
        %1614 = vmatmul.mubr.f32.gmra.mrb[0].mxu0 %v1544
        %v1615 = vpop.f32.mrb[0].mxu0
        %v1616 = vadd.f32 0.0, %v1615
        %v1617 = vpop.f32.mrb[0].mxu0
        %v1618 = vadd.f32 0.0, %v1617
        %1619 = vmatprep.mubr.f32.mxu0 0.0
        %1620 = vmatmul.mubr.f32.gmra.mrb[0].mxu0 %v1547
        %v1621 = vpop.f32.mrb[0].mxu0
        %v1622 = vadd.f32 0.0, %v1621
        %v1623 = vpop.f32.mrb[0].mxu0
        %v1624 = vadd.f32 0.0, %v1623
        %1625 = vdwg.mxu0
        %v1626 = vmax.f32 %v1616, 0.0
        %v1627 = vmax.f32 %v1618, 0.0
        %v1628 = vmax.f32 %v1622, 0.0
        %v1629 = vmax.f32 %v1624, 0.0
        %v1630 = vld [vmem:[%s9] sm:$0xff]
        %v1631 = vld [vmem:[%s9 + $0x8] sm:$0x3]
        %vm1632 = vcmask 80896
        %v1634 = vsel %vm1632, %v1630, 0
        %v1637 = vsel %vm1632, %v1631, 0
        %vm1639 = vcmask 1041408
        %v1641 = vsel %vm1639, %v1628, 0
        %v1644 = vsel %vm1639, %v1629, 0
        %1646 = vmatprep.subr.mxu0 %v1627
        %1647 = vmatpush1.msra.mxu0 %v1626
        %1648 = vmatprep.subr.mxu0 %v1644
        %1649 = vmatpush1.msra.mxu0 %v1641
        %1650 = vmatprep.subr.mxu0 0.0
        %1651 = vmatpush1.msra.mxu0 0.0
        %1652 = vmatprep.subr.mxu0 0.0
        %1653 = vmatpush1.msra.mxu0 0.0
        %1654 = vmatprep.subr.mxu0 0.0
        %1655 = vmatpush1.msra.mxu0 0.0
        %1656 = vmatprep.subr.mxu0 0.0
        %1657 = vmatpush1.msra.mxu0 0.0
        %1658 = vmatprep.subr.mxu0 0.0
        %1659 = vmatpush1.msra.mxu0 0.0
        %1660 = vmatprep.subr.mxu0 0.0
        %1661 = vmatpush1.msra.mxu0 0.0
        %1662 = vmatprep.subr.mxu0 0.0
        %1663 = vmatpush1.msra.mxu0 0.0
        %1664 = vmatprep.subr.mxu0 0.0
        %1665 = vmatpush1.msra.mxu0 0.0
        %1666 = vmatprep.subr.mxu0 0.0
        %1667 = vmatpush1.msra.mxu0 0.0
        %1668 = vmatprep.subr.mxu0 0.0
        %1669 = vmatpush1.msra.mxu0 0.0
        %1670 = vmatprep.subr.mxu0 0.0
        %1671 = vmatpush1.msra.mxu0 0.0
        %1672 = vmatprep.subr.mxu0 0.0
        %1673 = vmatpush1.msra.mxu0 0.0
        %1674 = vmatprep.subr.mxu0 0.0
        %1675 = vmatpush1.msra.mxu0 0.0
        %1676 = vmatprep.subr.mxu0 0.0
        %1677 = vmatpush1.msra.mxu0 0.0
        %1678 = vmatprep.subr.mxu0 0.0
        %1679 = vmatpush1.msra.mxu0 0.0
        %1680 = vmatprep.subr.mxu0 0.0
        %1681 = vmatpush1.msra.mxu0 0.0
        %1682 = vmatprep.subr.mxu0 0.0
        %1683 = vmatpush1.msra.mxu0 0.0
        %1684 = vmatprep.subr.mxu0 0.0
        %1685 = vmatpush1.msra.mxu0 0.0
        %1686 = vmatprep.subr.mxu0 0.0
        %1687 = vmatpush1.msra.mxu0 0.0
        %1688 = vmatprep.subr.mxu0 0.0
        %1689 = vmatpush1.msra.mxu0 0.0
        %1690 = vmatprep.subr.mxu0 0.0
        %1691 = vmatpush1.msra.mxu0 0.0
        %1692 = vmatprep.subr.mxu0 0.0
        %1693 = vmatpush1.msra.mxu0 0.0
        %1694 = vmatprep.subr.mxu0 0.0
        %1695 = vmatpush1.msra.mxu0 0.0
        %1696 = vmatprep.subr.mxu0 0.0
        %1697 = vmatpush1.msra.mxu0 0.0
        %1698 = vmatprep.subr.mxu0 0.0
        %1699 = vmatpush1.msra.mxu0 0.0
        %1700 = vmatprep.subr.mxu0 0.0
        %1701 = vmatpush1.msra.mxu0 0.0
        %1702 = vmatprep.subr.mxu0 0.0
        %1703 = vmatpush1.msra.mxu0 0.0
        %1704 = vmatprep.subr.mxu0 0.0
        %1705 = vmatpush1.msra.mxu0 0.0
        %1706 = vmatprep.subr.mxu0 0.0
        %1707 = vmatpush1.msra.mxu0 0.0
        %1708 = vmatprep.subr.mxu0 0.0
        %1709 = vmatpush1.msra.mxu0 0.0
        %1710 = vmatprep.mubr.f32.mxu0 0.0
        %1711 = vmatmul.mubr.f32.gmra.mrb[0].mxu0 %v1634
        %v1712 = vpop.f32.mrb[0].mxu0
        %v1713 = vadd.f32 0.0, %v1712
        %v1714 = vpop.f32.mrb[0].mxu0
        %v1715 = vadd.f32 0.0, %v1714
        %1716 = vmatprep.mubr.f32.mxu0 0.0
        %1717 = vmatmul.mubr.f32.gmra.mrb[0].mxu0 %v1637
        %v1718 = vpop.f32.mrb[0].mxu0
        %v1719 = vadd.f32 0.0, %v1718
        %v1720 = vpop.f32.mrb[0].mxu0
        %v1721 = vadd.f32 0.0, %v1720
        %1722 = vdwg.mxu0
        %v1723 = vmax.f32 %v1713, 0.0
        %v1724 = vmax.f32 %v1715, 0.0
        %v1725 = vmax.f32 %v1719, 0.0
        %v1726 = vmax.f32 %v1721, 0.0
        %v1727 = vld [vmem:[%s10] sm:$0x1]
        %v1729 = vsel %vm1632, %v1727, 0
        %v1732 = vsel %vm1639, %v1725, 0
        %v1735 = vsel %vm1639, %v1726, 0
        %1737 = vmatprep.subr.mxu0 %v1724
        %1738 = vmatpush1.msra.mxu0 %v1723
        %1739 = vmatprep.subr.mxu0 %v1735
        %1740 = vmatpush1.msra.mxu0 %v1732
        %1741 = vmatprep.subr.mxu0 0.0
        %1742 = vmatpush1.msra.mxu0 0.0
        %1743 = vmatprep.subr.mxu0 0.0
        %1744 = vmatpush1.msra.mxu0 0.0
        %1745 = vmatprep.subr.mxu0 0.0
        %1746 = vmatpush1.msra.mxu0 0.0
        %1747 = vmatprep.subr.mxu0 0.0
        %1748 = vmatpush1.msra.mxu0 0.0
        %1749 = vmatprep.subr.mxu0 0.0
        %1750 = vmatpush1.msra.mxu0 0.0
        %1751 = vmatprep.subr.mxu0 0.0
        %1752 = vmatpush1.msra.mxu0 0.0
        %1753 = vmatprep.subr.mxu0 0.0
        %1754 = vmatpush1.msra.mxu0 0.0
        %1755 = vmatprep.subr.mxu0 0.0
        %1756 = vmatpush1.msra.mxu0 0.0
        %1757 = vmatprep.subr.mxu0 0.0
        %1758 = vmatpush1.msra.mxu0 0.0
        %1759 = vmatprep.subr.mxu0 0.0
        %1760 = vmatpush1.msra.mxu0 0.0
        %1761 = vmatprep.subr.mxu0 0.0
        %1762 = vmatpush1.msra.mxu0 0.0
        %1763 = vmatprep.subr.mxu0 0.0
        %1764 = vmatpush1.msra.mxu0 0.0
        %1765 = vmatprep.subr.mxu0 0.0
        %1766 = vmatpush1.msra.mxu0 0.0
        %1767 = vmatprep.subr.mxu0 0.0
        %1768 = vmatpush1.msra.mxu0 0.0
        %1769 = vmatprep.subr.mxu0 0.0
        %1770 = vmatpush1.msra.mxu0 0.0
        %1771 = vmatprep.subr.mxu0 0.0
        %1772 = vmatpush1.msra.mxu0 0.0
        %1773 = vmatprep.subr.mxu0 0.0
        %1774 = vmatpush1.msra.mxu0 0.0
        %1775 = vmatprep.subr.mxu0 0.0
        %1776 = vmatpush1.msra.mxu0 0.0
        %1777 = vmatprep.subr.mxu0 0.0
        %1778 = vmatpush1.msra.mxu0 0.0
        %1779 = vmatprep.subr.mxu0 0.0
        %1780 = vmatpush1.msra.mxu0 0.0
        %1781 = vmatprep.subr.mxu0 0.0
        %1782 = vmatpush1.msra.mxu0 0.0
        %1783 = vmatprep.subr.mxu0 0.0
        %1784 = vmatpush1.msra.mxu0 0.0
        %1785 = vmatprep.subr.mxu0 0.0
        %1786 = vmatpush1.msra.mxu0 0.0
        %1787 = vmatprep.subr.mxu0 0.0
        %1788 = vmatpush1.msra.mxu0 0.0
        %1789 = vmatprep.subr.mxu0 0.0
        %1790 = vmatpush1.msra.mxu0 0.0
        %1791 = vmatprep.subr.mxu0 0.0
        %1792 = vmatpush1.msra.mxu0 0.0
        %1793 = vmatprep.subr.mxu0 0.0
        %1794 = vmatpush1.msra.mxu0 0.0
        %1795 = vmatprep.subr.mxu0 0.0
        %1796 = vmatpush1.msra.mxu0 0.0
        %1797 = vmatprep.subr.mxu0 0.0
        %1798 = vmatpush1.msra.mxu0 0.0
        %1799 = vmatprep.subr.mxu0 0.0
        %1800 = vmatpush1.msra.mxu0 0.0
        %1801 = vmatprep.mubr.f32.mxu0 0.0
        %1802 = vmatmul.mubr.f32.gmra.mrb[0].mxu0 %v1729
        %v1803 = vpop.f32.mrb[0].mxu0
        %v1804 = vadd.f32 0.0, %v1803
        %v1805 = vpop.f32.mrb[0].mxu0
        %v1806 = vadd.f32 0.0, %v1805
        %1807 = vdwg.mxu0
        %v1808 = vmul.f32 %v1804, 0.5
        %v1809 = vmul.f32 %v1806, 0.5
        %v1810 = vtanh.pop %v1808
        %v1811 = vtanh.pop %v1809
        %v1812 = vmul.f32 %v1810, 0.5
        %v1813 = vmul.f32 %v1811, 0.5
        %v1814 = vadd.f32 %v1812, 0.5
        %v1815 = vadd.f32 %v1813, 0.5
        %v1816 = vmul.f32 %v1814, 0.85
        %v1817 = vmul.f32 %v1815, 0.85
        %v1818 = vmul.f32 %v1426, 0.15
        %v1819 = vmul.f32 %v1427, 0.15
        %v1820 = vadd.f32 %v1816, %v1818
        %v1821 = vadd.f32 %v1817, %v1819
        %v1824 = vcombine.low %v1820, %v1821
        %v1826 = vunpack.c.l.s4 1966171168
        %v1827 = vunpack.c.0.s8 %v1826
        %v1828 = vlaneseq
        %v1829 = vshrl.u32 %v1828, 7
        %v1830 = vsub.s32 %v1827, %v1829
        %v1831 = vrot.slane %v1824, %v1830
        %v1833 = vunpack.c.l.s4 1966171168
        %v1834 = vunpack.c.0.s8 %v1833
        %v1835 = vlaneseq
        %v1836 = vshrl.u32 %v1835, 7
        %v1837 = vsub.s32 %v1834, %v1836
        %v1838 = vrot.slane %v1831, %v1837
        %1840 = vst.msk [vmem:[%s430] sm:$0x3] %vm1489, %v1838
        %s1841 = sand.u32 %s269, 1
        %s1842 = scalar_lea.sflag [#allocation5], %s1841
        %s1843 = sand.u32 %s269, 1
        %s1844 = smul.addr %s1843, 2
        %s1845 = scalar_lea.vmem [#allocation4], %s1844
        // Predicated region
        $region88: #{tpu_custom_call.1} parent=82 // pred_check
          %p1846 = pneg %p279
        $region89: #{tpu_custom_call.1} parent=82 // pred_check_branch
          %1848 = sbr.rel (%p1846) target = $region91
        $region90: #{tpu_custom_call.1} parent=82 // pred_region
          %s1850 = ssub.s32 32, 32
          %1851 = vsyncadd %s1842, %s1850
          %s1852 = smul.addr %s25, 2
          %s1853 = smul.addr %s1852, 16
          %s1854 = scalar_lea.hbm %s11, %s1853
          %s1856 = sshll.u32 %s1845, 4
          %s1857 = int_to_ptr.vmem [resolvable:$true] %s1856
          %1859 = dma.vmem_to_hbm [thread:$0]  %s1857, 32, %s1854, %s1842
        $region91: #{tpu_custom_call.1} parent=82 // pred_fallthru
          _
      $region83: #{tpu_custom_call.1} parent=5 // pred_fallthru
        _
      %p1860 = scmp.le.s32.totalorder 2, %s20
      // Predicated region
      $region92: #{tpu_custom_call.1} parent=5 // pred_check
        %p1861 = pneg %p1860
      $region93: #{tpu_custom_call.1} parent=5 // pred_check_branch
        %1863 = sbr.rel (%p1861) target = $region95
      $region94: #{tpu_custom_call.1} parent=5 // pred_region
        %s1864 = ssub.s32 %s20, 2
        // Predicated region
        $region96: #{tpu_custom_call.1} parent=94 // pred_check
          %p1865 = pneg %p285
        $region97: #{tpu_custom_call.1} parent=94 // pred_check_branch
          %1867 = sbr.rel (%p1865) target = $region99
        $region98: #{tpu_custom_call.1} parent=94 // pred_region
          %s1868 = sand.u32 %s270, 1
          %s1869 = scalar_lea.sflag [#allocation5], %s1868
          %s1870 = sand.u32 %s270, 1
          %s1871 = smul.addr %s1870, 2
          %s1872 = scalar_lea.vmem [#allocation4], %s1871
          %1873 = dma.done %s1869, 32
        $region99: #{tpu_custom_call.1} parent=94 // pred_fallthru
          _
      $region95: #{tpu_custom_call.1} parent=5 // pred_fallthru
        _
    $region6: #{tpu_custom_call.1} parent=1 // loop_footer
      %s24 = sadd.s32 1, %s20
    $region7: #{tpu_custom_call.1} parent=1 // loop_footer_branch
      %19 = sbr.rel target = $region3
    $region8: #{tpu_custom_call.1} parent=1 // loop_exit
      _
    %1874 = vsyncpa [#allocation5], 1
    %s1875 = scalar_lea.sflag [#allocation5], 1
    %1876 = vsyncpa %s1875, 1

</llo_original>
